<compile_context>
chip_gen: v7x
topology: tpu7x:2x2x1
jax: 0.10.0
libtpu: 0.0.40
codegen_flags: <defaults>
</compile_context>

<pallas_src>
import functools

import jax
import jax.numpy as jnp
from jax.experimental import pallas as pl
from jax.experimental.pallas import tpu as pltpu


MLP_HIDDEN = 300       # logical width of the classifier hidden layers
MLP_HIDDEN_PAD = 384   # lane-padded (multiple of 128) width used inside the kernel
OUT_PAD = 128          # lane-padded logits width (sliced back to N in the wrapper)


# --------------------------------------------------------------------------------------
# Fused kernel: GRU recurrence (returns last hidden state) + 3-layer MLP classifier.
#   PyTorch GRU gate math (gate order r, z, n):
#     r = sigmoid(x Wir + bir + h Whr + bhr)
#     z = sigmoid(x Wiz + biz + h Whz + bhz)
#     n = tanh   (x Win + bin + r * (h Whn + bhn))
#     h = (1 - z) * n + z * h
# --------------------------------------------------------------------------------------
def fused_gru_classifier_kernel(z_ref, wih_ref, whh_ref, bi_ref, bhn_ref,
                                w1_ref, b1_ref, w2_ref, b2_ref, w3_ref, b3_ref,
                                out_ref, *, BP, T, H):
    # ---- Hoisted input projection: one bf16 matmul covers every timestep ------
    # z_ref is time-major, batch padded to BP=8 rows per step: shape (T*BP, D).
    # bi_ref already contains b_ih + [b_hh_r, b_hh_z, 0], so r/z need no further
    # bias adds inside the loop.
    z_bf = z_ref[...].astype(jnp.bfloat16)                                     # (T*BP, D)
    gi_all = (jnp.dot(z_bf, wih_ref[...],
                      preferred_element_type=jnp.float32) + bi_ref[...])       # (T*BP, 3H)

    # Recurrence weight back to f32 once (hoisted, tiny) so the serial hidden
    # state chain accumulates in f32; storage/DMA stays bf16.
    whh = whh_ref[...].astype(jnp.float32)                                     # (H, 3H)
    bhn = jnp.broadcast_to(bhn_ref[...], (BP, H))                              # hoisted

    # ---- Serial recurrence, fully unrolled (T is small and static) ------------
    # NOTE: per-step (BP,H)@(H,3H) stays on the MXU; at H=16 a VPU broadcast-FMA
    # formulation is a possible v5e follow-up if the MXU round-trip dominates.
    h = jnp.zeros((BP, H), jnp.float32)
    for t in range(T):
        gi = gi_all[t * BP:(t + 1) * BP, :]                                    # aligned view
        gh = jnp.dot(h, whh, preferred_element_type=jnp.float32)               # (BP, 3H)
        rz = jax.nn.sigmoid(gi[:, :2 * H] + gh[:, :2 * H])                     # fused r|z
        r = rz[:, :H]
        zg = rz[:, H:]
        n = jnp.tanh(gi[:, 2 * H:] + r * (gh[:, 2 * H:] + bhn))
        h = n + zg * (h - n)                                                   # (1-z)n + z h

    # ---- Classifier MLP epilogue (lane-padded bf16 weights, f32 accumulate) ---
    a = jnp.maximum(jnp.dot(h.astype(jnp.bfloat16), w1_ref[...],
                            preferred_element_type=jnp.float32) + b1_ref[...], 0.0)
    a = jnp.maximum(jnp.dot(a.astype(jnp.bfloat16), w2_ref[...],
                            preferred_element_type=jnp.float32) + b2_ref[...], 0.0)
    out_ref[...] = (jnp.dot(a.astype(jnp.bfloat16), w3_ref[...],
                            preferred_element_type=jnp.float32)
                    + b3_ref[...]).astype(out_ref.dtype)


def create_classifier_forward(z, kparams, N):
    """z: (B, T, latent_dim).  Returns logits (B, N)."""
    B, T, D = z.shape
    H = kparams["whh"].shape[0]
    BP = max(8, ((B + 7) // 8) * 8)   # pad batch to a sublane tile

    # Single host-side repack: time-major + zero-pad batch rows to BP.
    z_tm = (jnp.zeros((T, BP, D), jnp.float32)
            .at[:, :B, :].set(jnp.transpose(z, (1, 0, 2)))
            .reshape(T * BP, D))

    kernel = functools.partial(fused_gru_classifier_kernel, BP=BP, T=T, H=H)
    vmem = lambda: pl.BlockSpec(memory_space=pltpu.MemorySpace.VMEM)

    out_padded = pl.pallas_call(
        kernel,
        out_shape=jax.ShapeDtypeStruct((BP, OUT_PAD), jnp.float32),
        in_specs=[vmem() for _ in range(11)],
        out_specs=vmem(),
    )(z_tm, kparams["wih"], kparams["whh"], kparams["bi"], kparams["bhn"],
      kparams["w1"], kparams["b1"], kparams["w2"], kparams["b2"],
      kparams["w3"], kparams["b3"])

    return out_padded[:B, :N]


# --------------------------------------------------------------------------------------
# Parameter construction (PyTorch layouts) + repack into the kernel's layouts.
# --------------------------------------------------------------------------------------
def init_torch_params(key, latent_dim, nhidden=16, N=2):
    ks = jax.random.split(key, 10)
    u = lambda k, shape, bound: jax.random.uniform(k, shape, jnp.float32, -bound, bound)
    g = 1.0 / jnp.sqrt(float(nhidden))

    p = dict(
        w_ih=u(ks[0], (3 * nhidden, latent_dim), g),   # (3H, D), gate order r,z,n
        w_hh=u(ks[1], (3 * nhidden, nhidden), g),      # (3H, H)
        b_ih=u(ks[2], (3 * nhidden,), g),
        b_hh=u(ks[3], (3 * nhidden,), g),
    )

    def linear(kw, kb, fan_in, fan_out):
        bound = 1.0 / jnp.sqrt(float(fan_in))
        return u(kw, (fan_out, fan_in), bound), u(kb, (fan_out,), bound)

    p["w1"], p["b1"] = linear(ks[4], ks[5], nhidden, MLP_HIDDEN)
    p["w2"], p["b2"] = linear(ks[6], ks[7], MLP_HIDDEN, MLP_HIDDEN)
    p["w3"], p["b3"] = linear(ks[8], ks[9], MLP_HIDDEN, N)
    return p


def prepare_kernel_params(p, nhidden, N):
    H = nhidden
    # GRU: transpose to (in, out), gates concatenated along the output dim; store bf16.
    wih = p["w_ih"].T.astype(jnp.bfloat16)             # (D, 3H)
    whh = p["w_hh"].T.astype(jnp.bfloat16)             # (H, 3H)
    # Fold b_hh for r and z into the input-projection bias; n's b_hh stays split.
    bi = (p["b_ih"]
          + jnp.concatenate([p["b_hh"][:2 * H], jnp.zeros((H,), jnp.float32)])
          ).reshape(1, 3 * H)
    bhn = p["b_hh"][2 * H:].reshape(1, H)

    # MLP: transpose to (in, out), zero-pad to lane-dense widths, store bf16 weights.
    hp = MLP_HIDDEN_PAD - MLP_HIDDEN
    op = OUT_PAD - N
    w1 = jnp.pad(p["w1"].T, ((0, 0), (0, hp))).astype(jnp.bfloat16)
    b1 = jnp.pad(p["b1"], (0, hp)).reshape(1, MLP_HIDDEN_PAD)
    w2 = jnp.pad(p["w2"].T, ((0, hp), (0, hp))).astype(jnp.bfloat16)
    b2 = jnp.pad(p["b2"], (0, hp)).reshape(1, MLP_HIDDEN_PAD)
    w3 = jnp.pad(p["w3"].T, ((0, hp), (0, op))).astype(jnp.bfloat16)
    b3 = jnp.pad(p["b3"], (0, op)).reshape(1, OUT_PAD)
    return dict(wih=wih, whh=whh, bi=bi, bhn=bhn,
                w1=w1, b1=b1, w2=w2, b2=b2, w3=w3, b3=b3)


# Pure-JAX reference (PyTorch semantics, full-precision f32 params) for validation.
def reference_forward(z, p, nhidden):
    B, T, _ = z.shape
    H = nhidden
    h = jnp.zeros((B, H), jnp.float32)
    for t in range(T):
        x_t = z[:, t, :]
        gi = x_t @ p["w_ih"].T + p["b_ih"]
        gh = h @ p["w_hh"].T + p["b_hh"]
        r = jax.nn.sigmoid(gi[:, :H] + gh[:, :H])
        zg = jax.nn.sigmoid(gi[:, H:2 * H] + gh[:, H:2 * H])
        n = jnp.tanh(gi[:, 2 * H:] + r * gh[:, 2 * H:])
        h = (1.0 - zg) * n + zg * h
    x = jnp.maximum(h @ p["w1"].T + p["b1"], 0.0)
    x = jnp.maximum(x @ p["w2"].T + p["b2"], 0.0)
    return x @ p["w3"].T + p["b3"]


if __name__ == "__main__":
    key = jax.random.PRNGKey(0)
    kz, kp = jax.random.split(key)

    B, T, latent_dim, nhidden, N = 2, 8, 4, 16, 2
    z = jax.random.normal(kz, (B, T, latent_dim), jnp.float32)

    tparams = init_torch_params(kp, latent_dim, nhidden, N)
    kparams = prepare_kernel_params(tparams, nhidden, N)

    forward = jax.jit(lambda zz, kp_: create_classifier_forward(zz, kp_, N))
    out = jax.block_until_ready(forward(z, kparams))

    ref = reference_forward(z, tparams, nhidden)
    assert out.shape == (B, N)
    # Tolerance loosened vs. the all-f32 version because matmul weights are
    # stored in bfloat16 inside the kernel (intentional DMA/MXU optimization).
    assert jnp.allclose(out, ref, atol=2e-2, rtol=2e-2), (out, ref)

    print("KERNEL_OK")
</pallas_src>

<mosaic_0001>
module attributes {stable_mosaic.version = 11 : i64} {
  func.func @fused_gru_classifier_kernel(%arg0: memref<64x4xf32, #tpu.memory_space<vmem>>, %arg1: memref<4x48xbf16, #tpu.memory_space<vmem>>, %arg2: memref<16x48xbf16, #tpu.memory_space<vmem>>, %arg3: memref<1x48xf32, #tpu.memory_space<vmem>>, %arg4: memref<1x16xf32, #tpu.memory_space<vmem>>, %arg5: memref<16x384xbf16, #tpu.memory_space<vmem>>, %arg6: memref<1x384xf32, #tpu.memory_space<vmem>>, %arg7: memref<384x384xbf16, #tpu.memory_space<vmem>>, %arg8: memref<1x384xf32, #tpu.memory_space<vmem>>, %arg9: memref<384x128xbf16, #tpu.memory_space<vmem>>, %arg10: memref<1x128xf32, #tpu.memory_space<vmem>>, %arg11: memref<8x128xf32, #tpu.memory_space<vmem>>) attributes {dimension_semantics = [], scalar_prefetch = 0 : i64, scratch_operands = 0 : i64, tpu.core_type = #tpu.core_type<tc>} {
    %c0 = arith.constant 0 : index
    %c0_0 = arith.constant 0 : index
    %0 = vector.load %arg0[%c0, %c0_0] : memref<64x4xf32, #tpu.memory_space<vmem>>, vector<64x4xf32>
    %1 = arith.truncf %0 : vector<64x4xf32> to vector<64x4xbf16>
    %c0_1 = arith.constant 0 : index
    %c0_2 = arith.constant 0 : index
    %2 = vector.load %arg1[%c0_1, %c0_2] : memref<4x48xbf16, #tpu.memory_space<vmem>>, vector<4x48xbf16>
    %cst = arith.constant dense<0.000000e+00> : vector<64x48xf32>
    %3 = tpu.matmul %1, %2, %cst {dimension_numbers = #tpu.dot_dimension_numbers<[1], [0], [0], [1], [0, 0, 1, 1], [], []>} : vector<64x4xbf16>, vector<4x48xbf16>, vector<64x48xf32> -> vector<64x48xf32>
    %c0_3 = arith.constant 0 : index
    %c0_4 = arith.constant 0 : index
    %4 = vector.load %arg3[%c0_3, %c0_4] : memref<1x48xf32, #tpu.memory_space<vmem>>, vector<1x48xf32>
    %5 = vector.broadcast %4 : vector<1x48xf32> to vector<64x48xf32>
    %6 = arith.addf %3, %5 : vector<64x48xf32>
    %c0_5 = arith.constant 0 : index
    %c0_6 = arith.constant 0 : index
    %7 = vector.load %arg2[%c0_5, %c0_6] : memref<16x48xbf16, #tpu.memory_space<vmem>>, vector<16x48xbf16>
    %8 = arith.extf %7 : vector<16x48xbf16> to vector<16x48xf32>
    %c0_7 = arith.constant 0 : index
    %c0_8 = arith.constant 0 : index
    %9 = vector.load %arg4[%c0_7, %c0_8] : memref<1x16xf32, #tpu.memory_space<vmem>>, vector<1x16xf32>
    %10 = vector.shape_cast %9 : vector<1x16xf32> to vector<1x16xf32>
    %11 = vector.broadcast %10 : vector<1x16xf32> to vector<8x16xf32>
    %cst_9 = arith.constant 0.000000e+00 : f32
    %12 = vector.broadcast %cst_9 : f32 to vector<8x16xf32>
    %13 = vector.extract_strided_slice %6 {offsets = [0, 0], sizes = [8, 48], strides = [1, 1]} : vector<64x48xf32> to vector<8x48xf32>
    %cst_10 = arith.constant dense<0.000000e+00> : vector<8x48xf32>
    %14 = tpu.matmul %12, %8, %cst_10 {dimension_numbers = #tpu.dot_dimension_numbers<[1], [0], [0], [1], [0, 0, 1, 1], [], []>} : vector<8x16xf32>, vector<16x48xf32>, vector<8x48xf32> -> vector<8x48xf32>
    %15 = vector.extract_strided_slice %13 {offsets = [0, 0], sizes = [8, 32], strides = [1, 1]} : vector<8x48xf32> to vector<8x32xf32>
    %16 = vector.extract_strided_slice %14 {offsets = [0, 0], sizes = [8, 32], strides = [1, 1]} : vector<8x48xf32> to vector<8x32xf32>
    %17 = arith.addf %15, %16 : vector<8x32xf32>
    %18 = arith.negf %17 : vector<8x32xf32>
    %19 = math.exp %18 : vector<8x32xf32>
    %cst_11 = arith.constant 1.000000e+00 : f32
    %20 = vector.broadcast %cst_11 : f32 to vector<8x32xf32>
    %21 = arith.addf %20, %19 : vector<8x32xf32>
    %22 = arith.divf %20, %21 : vector<8x32xf32>
    %23 = vector.extract_strided_slice %22 {offsets = [0, 0], sizes = [8, 16], strides = [1, 1]} : vector<8x32xf32> to vector<8x16xf32>
    %24 = vector.extract_strided_slice %22 {offsets = [0, 16], sizes = [8, 16], strides = [1, 1]} : vector<8x32xf32> to vector<8x16xf32>
    %25 = vector.extract_strided_slice %13 {offsets = [0, 32], sizes = [8, 16], strides = [1, 1]} : vector<8x48xf32> to vector<8x16xf32>
    %26 = vector.extract_strided_slice %14 {offsets = [0, 32], sizes = [8, 16], strides = [1, 1]} : vector<8x48xf32> to vector<8x16xf32>
    %27 = arith.addf %26, %11 : vector<8x16xf32>
    %28 = arith.mulf %23, %27 : vector<8x16xf32>
    %29 = arith.addf %25, %28 : vector<8x16xf32>
    %30 = math.tanh %29 : vector<8x16xf32>
    %31 = arith.subf %12, %30 : vector<8x16xf32>
    %32 = arith.mulf %24, %31 : vector<8x16xf32>
    %33 = arith.addf %30, %32 : vector<8x16xf32>
    %34 = vector.extract_strided_slice %6 {offsets = [8, 0], sizes = [8, 48], strides = [1, 1]} : vector<64x48xf32> to vector<8x48xf32>
    %cst_12 = arith.constant dense<0.000000e+00> : vector<8x48xf32>
    %35 = tpu.matmul %33, %8, %cst_12 {dimension_numbers = #tpu.dot_dimension_numbers<[1], [0], [0], [1], [0, 0, 1, 1], [], []>} : vector<8x16xf32>, vector<16x48xf32>, vector<8x48xf32> -> vector<8x48xf32>
    %36 = vector.extract_strided_slice %34 {offsets = [0, 0], sizes = [8, 32], strides = [1, 1]} : vector<8x48xf32> to vector<8x32xf32>
    %37 = vector.extract_strided_slice %35 {offsets = [0, 0], sizes = [8, 32], strides = [1, 1]} : vector<8x48xf32> to vector<8x32xf32>
    %38 = arith.addf %36, %37 : vector<8x32xf32>
    %39 = arith.negf %38 : vector<8x32xf32>
    %40 = math.exp %39 : vector<8x32xf32>
    %cst_13 = arith.constant 1.000000e+00 : f32
    %41 = vector.broadcast %cst_13 : f32 to vector<8x32xf32>
    %42 = arith.addf %41, %40 : vector<8x32xf32>
    %43 = arith.divf %41, %42 : vector<8x32xf32>
    %44 = vector.extract_strided_slice %43 {offsets = [0, 0], sizes = [8, 16], strides = [1, 1]} : vector<8x32xf32> to vector<8x16xf32>
    %45 = vector.extract_strided_slice %43 {offsets = [0, 16], sizes = [8, 16], strides = [1, 1]} : vector<8x32xf32> to vector<8x16xf32>
    %46 = vector.extract_strided_slice %34 {offsets = [0, 32], sizes = [8, 16], strides = [1, 1]} : vector<8x48xf32> to vector<8x16xf32>
    %47 = vector.extract_strided_slice %35 {offsets = [0, 32], sizes = [8, 16], strides = [1, 1]} : vector<8x48xf32> to vector<8x16xf32>
    %48 = arith.addf %47, %11 : vector<8x16xf32>
    %49 = arith.mulf %44, %48 : vector<8x16xf32>
    %50 = arith.addf %46, %49 : vector<8x16xf32>
    %51 = math.tanh %50 : vector<8x16xf32>
    %52 = arith.subf %33, %51 : vector<8x16xf32>
    %53 = arith.mulf %45, %52 : vector<8x16xf32>
    %54 = arith.addf %51, %53 : vector<8x16xf32>
    %55 = vector.extract_strided_slice %6 {offsets = [16, 0], sizes = [8, 48], strides = [1, 1]} : vector<64x48xf32> to vector<8x48xf32>
    %cst_14 = arith.constant dense<0.000000e+00> : vector<8x48xf32>
    %56 = tpu.matmul %54, %8, %cst_14 {dimension_numbers = #tpu.dot_dimension_numbers<[1], [0], [0], [1], [0, 0, 1, 1], [], []>} : vector<8x16xf32>, vector<16x48xf32>, vector<8x48xf32> -> vector<8x48xf32>
    %57 = vector.extract_strided_slice %55 {offsets = [0, 0], sizes = [8, 32], strides = [1, 1]} : vector<8x48xf32> to vector<8x32xf32>
    %58 = vector.extract_strided_slice %56 {offsets = [0, 0], sizes = [8, 32], strides = [1, 1]} : vector<8x48xf32> to vector<8x32xf32>
    %59 = arith.addf %57, %58 : vector<8x32xf32>
    %60 = arith.negf %59 : vector<8x32xf32>
    %61 = math.exp %60 : vector<8x32xf32>
    %cst_15 = arith.constant 1.000000e+00 : f32
    %62 = vector.broadcast %cst_15 : f32 to vector<8x32xf32>
    %63 = arith.addf %62, %61 : vector<8x32xf32>
    %64 = arith.divf %62, %63 : vector<8x32xf32>
    %65 = vector.extract_strided_slice %64 {offsets = [0, 0], sizes = [8, 16], strides = [1, 1]} : vector<8x32xf32> to vector<8x16xf32>
    %66 = vector.extract_strided_slice %64 {offsets = [0, 16], sizes = [8, 16], strides = [1, 1]} : vector<8x32xf32> to vector<8x16xf32>
    %67 = vector.extract_strided_slice %55 {offsets = [0, 32], sizes = [8, 16], strides = [1, 1]} : vector<8x48xf32> to vector<8x16xf32>
    %68 = vector.extract_strided_slice %56 {offsets = [0, 32], sizes = [8, 16], strides = [1, 1]} : vector<8x48xf32> to vector<8x16xf32>
    %69 = arith.addf %68, %11 : vector<8x16xf32>
    %70 = arith.mulf %65, %69 : vector<8x16xf32>
    %71 = arith.addf %67, %70 : vector<8x16xf32>
    %72 = math.tanh %71 : vector<8x16xf32>
    %73 = arith.subf %54, %72 : vector<8x16xf32>
    %74 = arith.mulf %66, %73 : vector<8x16xf32>
    %75 = arith.addf %72, %74 : vector<8x16xf32>
    %76 = vector.extract_strided_slice %6 {offsets = [24, 0], sizes = [8, 48], strides = [1, 1]} : vector<64x48xf32> to vector<8x48xf32>
    %cst_16 = arith.constant dense<0.000000e+00> : vector<8x48xf32>
    %77 = tpu.matmul %75, %8, %cst_16 {dimension_numbers = #tpu.dot_dimension_numbers<[1], [0], [0], [1], [0, 0, 1, 1], [], []>} : vector<8x16xf32>, vector<16x48xf32>, vector<8x48xf32> -> vector<8x48xf32>
    %78 = vector.extract_strided_slice %76 {offsets = [0, 0], sizes = [8, 32], strides = [1, 1]} : vector<8x48xf32> to vector<8x32xf32>
    %79 = vector.extract_strided_slice %77 {offsets = [0, 0], sizes = [8, 32], strides = [1, 1]} : vector<8x48xf32> to vector<8x32xf32>
    %80 = arith.addf %78, %79 : vector<8x32xf32>
    %81 = arith.negf %80 : vector<8x32xf32>
    %82 = math.exp %81 : vector<8x32xf32>
    %cst_17 = arith.constant 1.000000e+00 : f32
    %83 = vector.broadcast %cst_17 : f32 to vector<8x32xf32>
    %84 = arith.addf %83, %82 : vector<8x32xf32>
    %85 = arith.divf %83, %84 : vector<8x32xf32>
    %86 = vector.extract_strided_slice %85 {offsets = [0, 0], sizes = [8, 16], strides = [1, 1]} : vector<8x32xf32> to vector<8x16xf32>
    %87 = vector.extract_strided_slice %85 {offsets = [0, 16], sizes = [8, 16], strides = [1, 1]} : vector<8x32xf32> to vector<8x16xf32>
    %88 = vector.extract_strided_slice %76 {offsets = [0, 32], sizes = [8, 16], strides = [1, 1]} : vector<8x48xf32> to vector<8x16xf32>
    %89 = vector.extract_strided_slice %77 {offsets = [0, 32], sizes = [8, 16], strides = [1, 1]} : vector<8x48xf32> to vector<8x16xf32>
    %90 = arith.addf %89, %11 : vector<8x16xf32>
    %91 = arith.mulf %86, %90 : vector<8x16xf32>
    %92 = arith.addf %88, %91 : vector<8x16xf32>
    %93 = math.tanh %92 : vector<8x16xf32>
    %94 = arith.subf %75, %93 : vector<8x16xf32>
    %95 = arith.mulf %87, %94 : vector<8x16xf32>
    %96 = arith.addf %93, %95 : vector<8x16xf32>
    %97 = vector.extract_strided_slice %6 {offsets = [32, 0], sizes = [8, 48], strides = [1, 1]} : vector<64x48xf32> to vector<8x48xf32>
    %cst_18 = arith.constant dense<0.000000e+00> : vector<8x48xf32>
    %98 = tpu.matmul %96, %8, %cst_18 {dimension_numbers = #tpu.dot_dimension_numbers<[1], [0], [0], [1], [0, 0, 1, 1], [], []>} : vector<8x16xf32>, vector<16x48xf32>, vector<8x48xf32> -> vector<8x48xf32>
    %99 = vector.extract_strided_slice %97 {offsets = [0, 0], sizes = [8, 32], strides = [1, 1]} : vector<8x48xf32> to vector<8x32xf32>
    %100 = vector.extract_strided_slice %98 {offsets = [0, 0], sizes = [8, 32], strides = [1, 1]} : vector<8x48xf32> to vector<8x32xf32>
    %101 = arith.addf %99, %100 : vector<8x32xf32>
    %102 = arith.negf %101 : vector<8x32xf32>
    %103 = math.exp %102 : vector<8x32xf32>
    %cst_19 = arith.constant 1.000000e+00 : f32
    %104 = vector.broadcast %cst_19 : f32 to vector<8x32xf32>
    %105 = arith.addf %104, %103 : vector<8x32xf32>
    %106 = arith.divf %104, %105 : vector<8x32xf32>
    %107 = vector.extract_strided_slice %106 {offsets = [0, 0], sizes = [8, 16], strides = [1, 1]} : vector<8x32xf32> to vector<8x16xf32>
    %108 = vector.extract_strided_slice %106 {offsets = [0, 16], sizes = [8, 16], strides = [1, 1]} : vector<8x32xf32> to vector<8x16xf32>
    %109 = vector.extract_strided_slice %97 {offsets = [0, 32], sizes = [8, 16], strides = [1, 1]} : vector<8x48xf32> to vector<8x16xf32>
    %110 = vector.extract_strided_slice %98 {offsets = [0, 32], sizes = [8, 16], strides = [1, 1]} : vector<8x48xf32> to vector<8x16xf32>
    %111 = arith.addf %110, %11 : vector<8x16xf32>
    %112 = arith.mulf %107, %111 : vector<8x16xf32>
    %113 = arith.addf %109, %112 : vector<8x16xf32>
    %114 = math.tanh %113 : vector<8x16xf32>
    %115 = arith.subf %96, %114 : vector<8x16xf32>
    %116 = arith.mulf %108, %115 : vector<8x16xf32>
    %117 = arith.addf %114, %116 : vector<8x16xf32>
    %118 = vector.extract_strided_slice %6 {offsets = [40, 0], sizes = [8, 48], strides = [1, 1]} : vector<64x48xf32> to vector<8x48xf32>
    %cst_20 = arith.constant dense<0.000000e+00> : vector<8x48xf32>
    %119 = tpu.matmul %117, %8, %cst_20 {dimension_numbers = #tpu.dot_dimension_numbers<[1], [0], [0], [1], [0, 0, 1, 1], [], []>} : vector<8x16xf32>, vector<16x48xf32>, vector<8x48xf32> -> vector<8x48xf32>
    %120 = vector.extract_strided_slice %118 {offsets = [0, 0], sizes = [8, 32], strides = [1, 1]} : vector<8x48xf32> to vector<8x32xf32>
    %121 = vector.extract_strided_slice %119 {offsets = [0, 0], sizes = [8, 32], strides = [1, 1]} : vector<8x48xf32> to vector<8x32xf32>
    %122 = arith.addf %120, %121 : vector<8x32xf32>
    %123 = arith.negf %122 : vector<8x32xf32>
    %124 = math.exp %123 : vector<8x32xf32>
    %cst_21 = arith.constant 1.000000e+00 : f32
    %125 = vector.broadcast %cst_21 : f32 to vector<8x32xf32>
    %126 = arith.addf %125, %124 : vector<8x32xf32>
    %127 = arith.divf %125, %126 : vector<8x32xf32>
    %128 = vector.extract_strided_slice %127 {offsets = [0, 0], sizes = [8, 16], strides = [1, 1]} : vector<8x32xf32> to vector<8x16xf32>
    %129 = vector.extract_strided_slice %127 {offsets = [0, 16], sizes = [8, 16], strides = [1, 1]} : vector<8x32xf32> to vector<8x16xf32>
    %130 = vector.extract_strided_slice %118 {offsets = [0, 32], sizes = [8, 16], strides = [1, 1]} : vector<8x48xf32> to vector<8x16xf32>
    %131 = vector.extract_strided_slice %119 {offsets = [0, 32], sizes = [8, 16], strides = [1, 1]} : vector<8x48xf32> to vector<8x16xf32>
    %132 = arith.addf %131, %11 : vector<8x16xf32>
    %133 = arith.mulf %128, %132 : vector<8x16xf32>
    %134 = arith.addf %130, %133 : vector<8x16xf32>
    %135 = math.tanh %134 : vector<8x16xf32>
    %136 = arith.subf %117, %135 : vector<8x16xf32>
    %137 = arith.mulf %129, %136 : vector<8x16xf32>
    %138 = arith.addf %135, %137 : vector<8x16xf32>
    %139 = vector.extract_strided_slice %6 {offsets = [48, 0], sizes = [8, 48], strides = [1, 1]} : vector<64x48xf32> to vector<8x48xf32>
    %cst_22 = arith.constant dense<0.000000e+00> : vector<8x48xf32>
    %140 = tpu.matmul %138, %8, %cst_22 {dimension_numbers = #tpu.dot_dimension_numbers<[1], [0], [0], [1], [0, 0, 1, 1], [], []>} : vector<8x16xf32>, vector<16x48xf32>, vector<8x48xf32> -> vector<8x48xf32>
    %141 = vector.extract_strided_slice %139 {offsets = [0, 0], sizes = [8, 32], strides = [1, 1]} : vector<8x48xf32> to vector<8x32xf32>
    %142 = vector.extract_strided_slice %140 {offsets = [0, 0], sizes = [8, 32], strides = [1, 1]} : vector<8x48xf32> to vector<8x32xf32>
    %143 = arith.addf %141, %142 : vector<8x32xf32>
    %144 = arith.negf %143 : vector<8x32xf32>
    %145 = math.exp %144 : vector<8x32xf32>
    %cst_23 = arith.constant 1.000000e+00 : f32
    %146 = vector.broadcast %cst_23 : f32 to vector<8x32xf32>
    %147 = arith.addf %146, %145 : vector<8x32xf32>
    %148 = arith.divf %146, %147 : vector<8x32xf32>
    %149 = vector.extract_strided_slice %148 {offsets = [0, 0], sizes = [8, 16], strides = [1, 1]} : vector<8x32xf32> to vector<8x16xf32>
    %150 = vector.extract_strided_slice %148 {offsets = [0, 16], sizes = [8, 16], strides = [1, 1]} : vector<8x32xf32> to vector<8x16xf32>
    %151 = vector.extract_strided_slice %139 {offsets = [0, 32], sizes = [8, 16], strides = [1, 1]} : vector<8x48xf32> to vector<8x16xf32>
    %152 = vector.extract_strided_slice %140 {offsets = [0, 32], sizes = [8, 16], strides = [1, 1]} : vector<8x48xf32> to vector<8x16xf32>
    %153 = arith.addf %152, %11 : vector<8x16xf32>
    %154 = arith.mulf %149, %153 : vector<8x16xf32>
    %155 = arith.addf %151, %154 : vector<8x16xf32>
    %156 = math.tanh %155 : vector<8x16xf32>
    %157 = arith.subf %138, %156 : vector<8x16xf32>
    %158 = arith.mulf %150, %157 : vector<8x16xf32>
    %159 = arith.addf %156, %158 : vector<8x16xf32>
    %160 = vector.extract_strided_slice %6 {offsets = [56, 0], sizes = [8, 48], strides = [1, 1]} : vector<64x48xf32> to vector<8x48xf32>
    %cst_24 = arith.constant dense<0.000000e+00> : vector<8x48xf32>
    %161 = tpu.matmul %159, %8, %cst_24 {dimension_numbers = #tpu.dot_dimension_numbers<[1], [0], [0], [1], [0, 0, 1, 1], [], []>} : vector<8x16xf32>, vector<16x48xf32>, vector<8x48xf32> -> vector<8x48xf32>
    %162 = vector.extract_strided_slice %160 {offsets = [0, 0], sizes = [8, 32], strides = [1, 1]} : vector<8x48xf32> to vector<8x32xf32>
    %163 = vector.extract_strided_slice %161 {offsets = [0, 0], sizes = [8, 32], strides = [1, 1]} : vector<8x48xf32> to vector<8x32xf32>
    %164 = arith.addf %162, %163 : vector<8x32xf32>
    %165 = arith.negf %164 : vector<8x32xf32>
    %166 = math.exp %165 : vector<8x32xf32>
    %cst_25 = arith.constant 1.000000e+00 : f32
    %167 = vector.broadcast %cst_25 : f32 to vector<8x32xf32>
    %168 = arith.addf %167, %166 : vector<8x32xf32>
    %169 = arith.divf %167, %168 : vector<8x32xf32>
    %170 = vector.extract_strided_slice %169 {offsets = [0, 0], sizes = [8, 16], strides = [1, 1]} : vector<8x32xf32> to vector<8x16xf32>
    %171 = vector.extract_strided_slice %169 {offsets = [0, 16], sizes = [8, 16], strides = [1, 1]} : vector<8x32xf32> to vector<8x16xf32>
    %172 = vector.extract_strided_slice %160 {offsets = [0, 32], sizes = [8, 16], strides = [1, 1]} : vector<8x48xf32> to vector<8x16xf32>
    %173 = vector.extract_strided_slice %161 {offsets = [0, 32], sizes = [8, 16], strides = [1, 1]} : vector<8x48xf32> to vector<8x16xf32>
    %174 = arith.addf %173, %11 : vector<8x16xf32>
    %175 = arith.mulf %170, %174 : vector<8x16xf32>
    %176 = arith.addf %172, %175 : vector<8x16xf32>
    %177 = math.tanh %176 : vector<8x16xf32>
    %178 = arith.subf %159, %177 : vector<8x16xf32>
    %179 = arith.mulf %171, %178 : vector<8x16xf32>
    %180 = arith.addf %177, %179 : vector<8x16xf32>
    %181 = arith.truncf %180 : vector<8x16xf32> to vector<8x16xbf16>
    %c0_26 = arith.constant 0 : index
    %c0_27 = arith.constant 0 : index
    %182 = vector.load %arg5[%c0_26, %c0_27] : memref<16x384xbf16, #tpu.memory_space<vmem>>, vector<16x384xbf16>
    %cst_28 = arith.constant dense<0.000000e+00> : vector<8x384xf32>
    %183 = tpu.matmul %181, %182, %cst_28 {dimension_numbers = #tpu.dot_dimension_numbers<[1], [0], [0], [1], [0, 0, 1, 1], [], []>} : vector<8x16xbf16>, vector<16x384xbf16>, vector<8x384xf32> -> vector<8x384xf32>
    %c0_29 = arith.constant 0 : index
    %c0_30 = arith.constant 0 : index
    %184 = vector.load %arg6[%c0_29, %c0_30] : memref<1x384xf32, #tpu.memory_space<vmem>>, vector<1x384xf32>
    %185 = vector.broadcast %184 : vector<1x384xf32> to vector<8x384xf32>
    %186 = arith.addf %183, %185 : vector<8x384xf32>
    %cst_31 = arith.constant 0.000000e+00 : f32
    %187 = vector.broadcast %cst_31 : f32 to vector<8x384xf32>
    %188 = arith.maximumf %186, %187 : vector<8x384xf32>
    %189 = arith.truncf %188 : vector<8x384xf32> to vector<8x384xbf16>
    %c0_32 = arith.constant 0 : index
    %c0_33 = arith.constant 0 : index
    %190 = vector.load %arg7[%c0_32, %c0_33] : memref<384x384xbf16, #tpu.memory_space<vmem>>, vector<384x384xbf16>
    %cst_34 = arith.constant dense<0.000000e+00> : vector<8x384xf32>
    %191 = tpu.matmul %189, %190, %cst_34 {dimension_numbers = #tpu.dot_dimension_numbers<[1], [0], [0], [1], [0, 0, 1, 1], [], []>} : vector<8x384xbf16>, vector<384x384xbf16>, vector<8x384xf32> -> vector<8x384xf32>
    %c0_35 = arith.constant 0 : index
    %c0_36 = arith.constant 0 : index
    %192 = vector.load %arg8[%c0_35, %c0_36] : memref<1x384xf32, #tpu.memory_space<vmem>>, vector<1x384xf32>
    %193 = vector.broadcast %192 : vector<1x384xf32> to vector<8x384xf32>
    %194 = arith.addf %191, %193 : vector<8x384xf32>
    %cst_37 = arith.constant 0.000000e+00 : f32
    %195 = vector.broadcast %cst_37 : f32 to vector<8x384xf32>
    %196 = arith.maximumf %194, %195 : vector<8x384xf32>
    %197 = arith.truncf %196 : vector<8x384xf32> to vector<8x384xbf16>
    %c0_38 = arith.constant 0 : index
    %c0_39 = arith.constant 0 : index
    %198 = vector.load %arg9[%c0_38, %c0_39] : memref<384x128xbf16, #tpu.memory_space<vmem>>, vector<384x128xbf16>
    %cst_40 = arith.constant dense<0.000000e+00> : vector<8x128xf32>
    %199 = tpu.matmul %197, %198, %cst_40 {dimension_numbers = #tpu.dot_dimension_numbers<[1], [0], [0], [1], [0, 0, 1, 1], [], []>} : vector<8x384xbf16>, vector<384x128xbf16>, vector<8x128xf32> -> vector<8x128xf32>
    %c0_41 = arith.constant 0 : index
    %c0_42 = arith.constant 0 : index
    %200 = vector.load %arg10[%c0_41, %c0_42] : memref<1x128xf32, #tpu.memory_space<vmem>>, vector<1x128xf32>
    %201 = vector.broadcast %200 : vector<1x128xf32> to vector<8x128xf32>
    %202 = arith.addf %199, %201 : vector<8x128xf32>
    %c0_43 = arith.constant 0 : index
    %c0_44 = arith.constant 0 : index
    %203 = vector.load %arg11[%c0_43, %c0_44] : memref<8x128xf32, #tpu.memory_space<vmem>>, vector<8x128xf32>
    tpu.vector_store %arg11[%c0_43, %c0_44], %202 {strides = array<i32>} : memref<8x128xf32, #tpu.memory_space<vmem>>, vector<8x128xf32>,
    return
  }
}

</mosaic_0001>

<llo_original>
// kernel: _lambda_.1
$region0: #{_lambda_.1}
  #allocation0 [shape = 'u32[]', space=smem, size = 0x4, offset = 0x4, fixed_abs, tag = 'smem constant byte address 0x4 - core index']
  #allocation1 [shape = 'u32[144,128]{1,0:T(1,128)}', space=vmem, size = 0x12000, scoped, tag = 'internal scratch']
  %s0 = inlined_call_operand.vmem [shape: f32[64,4], index: 0, kind: input, shape index: {}]
  %s1 = inlined_call_operand.vmem [shape: bf16[4,48], index: 1, kind: input, shape index: {}]
  %s2 = inlined_call_operand.vmem [shape: bf16[16,48], index: 2, kind: input, shape index: {}]
  %s3 = inlined_call_operand.vmem [shape: f32[1,48], index: 3, kind: input, shape index: {}]
  %s4 = inlined_call_operand.vmem [shape: f32[1,16], index: 4, kind: input, shape index: {}]
  %s5 = inlined_call_operand.vmem [shape: bf16[16,384], index: 5, kind: input, shape index: {}]
  %s6 = inlined_call_operand.vmem [shape: f32[1,384], index: 6, kind: input, shape index: {}]
  %s7 = inlined_call_operand.hbm [shape: bf16[384,384], index: 7, kind: input, shape index: {}]
  %s8 = inlined_call_operand.vmem [shape: f32[1,384], index: 8, kind: input, shape index: {}]
  %s9 = inlined_call_operand.hbm [shape: bf16[384,128], index: 9, kind: input, shape index: {}]
  %s10 = inlined_call_operand.vmem [shape: f32[1,128], index: 10, kind: input, shape index: {}]
  %s11 = inlined_call_operand.vmem [shape: f32[8,128], index: 11, kind: output, shape index: {}]
  %s12 = sld [smem:[#allocation0]]
  $region62: #{_lambda_.1} parent=0
    _
  %s14 = ssub.s32 1, %s12
  %s15 = scalar_select 0, %s14, %s12
  $region1: #{_lambda_.1} parent=0
    #allocation2 [shape = 'u8[294912]{0}', space=vmem, size = 0x48000, scoped, tag = 'input window, operand 7, single buffered']
    #allocation3 [shape = 's32[1]{0}', space=sflag, size = 0x4, scoped, tag = 'scoped memory for _lambda_.1']
    #allocation4 [shape = 'u8[98304]{0}', space=vmem, size = 0x18000, scoped, tag = 'input window, operand 9, single buffered']
    #allocation5 [shape = 's32[1]{0}', space=sflag, size = 0x4, scoped, tag = 'scoped memory for _lambda_.1']
    %16 = vsyncpa [#allocation3], 0
    %17 = vsyncpa [#allocation5], 0
    // Predicated region
    $region2: #{_lambda_.1} parent=1 // pred_check
      _
    $region3: #{_lambda_.1} parent=1 // pred_check_branch
      %19 = sbr.rel (0) target = $region5
    $region4: #{_lambda_.1} parent=1 // pred_region
      _
    $region5: #{_lambda_.1} parent=1 // pred_fallthru
      _
    // Predicated region
    $region6: #{_lambda_.1} parent=1 // pred_check
      _
    $region7: #{_lambda_.1} parent=1 // pred_check_branch
      %21 = sbr.rel (0) target = $region9
    $region8: #{_lambda_.1} parent=1 // pred_region
      _
    $region9: #{_lambda_.1} parent=1 // pred_fallthru
      _
    // Predicated region
    $region10: #{_lambda_.1} parent=1 // pred_check
      _
    $region11: #{_lambda_.1} parent=1 // pred_check_branch
      %23 = sbr.rel (0) target = $region13
    $region12: #{_lambda_.1} parent=1 // pred_region
      _
    $region13: #{_lambda_.1} parent=1 // pred_fallthru
      _
    // Predicated region
    $region14: #{_lambda_.1} parent=1 // pred_check
      _
    $region15: #{_lambda_.1} parent=1 // pred_check_branch
      %25 = sbr.rel (0) target = $region17
    $region16: #{_lambda_.1} parent=1 // pred_region
      _
    $region17: #{_lambda_.1} parent=1 // pred_fallthru
      _
    // Predicated region
    $region18: #{_lambda_.1} parent=1 // pred_check
      _
    $region19: #{_lambda_.1} parent=1 // pred_check_branch
      %27 = sbr.rel (0) target = $region21
    $region20: #{_lambda_.1} parent=1 // pred_region
      _
    $region21: #{_lambda_.1} parent=1 // pred_fallthru
      _
    // Predicated region
    $region22: #{_lambda_.1} parent=1 // pred_check
      _
    $region23: #{_lambda_.1} parent=1 // pred_check_branch
      %29 = sbr.rel (0) target = $region25
    $region24: #{_lambda_.1} parent=1 // pred_region
      _
    $region25: #{_lambda_.1} parent=1 // pred_fallthru
      _
    // Predicated region
    $region26: #{_lambda_.1} parent=1 // pred_check
      _
    $region27: #{_lambda_.1} parent=1 // pred_check_branch
      %31 = sbr.rel (0) target = $region29
    $region28: #{_lambda_.1} parent=1 // pred_region
      _
    $region29: #{_lambda_.1} parent=1 // pred_fallthru
      _
    // Predicated region
    $region30: #{_lambda_.1} parent=1 // pred_check
      _
    $region31: #{_lambda_.1} parent=1 // pred_check_branch
      %33 = sbr.rel (0) target = $region33
    $region32: #{_lambda_.1} parent=1 // pred_region
      %s35 = ssub.s32 9216, 9216
      %36 = vsyncadd [#allocation3], %s35
      %s37 = sshll.u32 [#allocation2], 4
      %s38 = int_to_ptr.vmem [resolvable:$true] %s37
      %43 = dma.hbm_to_vmem [thread:$0]  %s7, 9216, %s38, [#allocation3], 192, 192, 12
    $region33: #{_lambda_.1} parent=1 // pred_fallthru
      _
    // Predicated region
    $region34: #{_lambda_.1} parent=1 // pred_check
      _
    $region35: #{_lambda_.1} parent=1 // pred_check_branch
      %45 = sbr.rel (0) target = $region37
    $region36: #{_lambda_.1} parent=1 // pred_region
      _
    $region37: #{_lambda_.1} parent=1 // pred_fallthru
      _
    // Predicated region
    $region38: #{_lambda_.1} parent=1 // pred_check
      _
    $region39: #{_lambda_.1} parent=1 // pred_check_branch
      %47 = sbr.rel (0) target = $region41
    $region40: #{_lambda_.1} parent=1 // pred_region
      %s49 = ssub.s32 3072, 3072
      %50 = vsyncadd [#allocation5], %s49
      %s51 = sshll.u32 [#allocation4], 4
      %s52 = int_to_ptr.vmem [resolvable:$true] %s51
      %57 = dma.hbm_to_vmem [thread:$0]  %s9, 3072, %s52, [#allocation5], 64, 64, 4
    $region41: #{_lambda_.1} parent=1 // pred_fallthru
      _
    // Predicated region
    $region42: #{_lambda_.1} parent=1 // pred_check
      _
    $region43: #{_lambda_.1} parent=1 // pred_check_branch
      %59 = sbr.rel (0) target = $region45
    $region44: #{_lambda_.1} parent=1 // pred_region
      _
    $region45: #{_lambda_.1} parent=1 // pred_fallthru
      _
    // Predicated region
    $region46: #{_lambda_.1} parent=1 // pred_check
      _
    $region47: #{_lambda_.1} parent=1 // pred_check_branch
      %61 = sbr.rel (0) target = $region49
    $region48: #{_lambda_.1} parent=1 // pred_region
      %62 = dma.done [#allocation3], 9216
    $region49: #{_lambda_.1} parent=1 // pred_fallthru
      _
    // Predicated region
    $region50: #{_lambda_.1} parent=1 // pred_check
      _
    $region51: #{_lambda_.1} parent=1 // pred_check_branch
      %64 = sbr.rel (0) target = $region53
    $region52: #{_lambda_.1} parent=1 // pred_region
      %65 = dma.done [#allocation5], 3072
    $region53: #{_lambda_.1} parent=1 // pred_fallthru
      _
    %v67 = vld [vmem:[%s0] sm:$0xff]
    %v68 = vld [vmem:[%s0 + $0x8] sm:$0xff]
    %v69 = vld [vmem:[%s0 + $0x10] sm:$0xff]
    %v70 = vld [vmem:[%s0 + $0x18] sm:$0xff]
    %v71 = vld [vmem:[%s0 + $0x20] sm:$0xff]
    %v72 = vld [vmem:[%s0 + $0x28] sm:$0xff]
    %v73 = vld [vmem:[%s0 + $0x30] sm:$0xff]
    %v74 = vld [vmem:[%s0 + $0x38] sm:$0xff]
    %v75 = vpack.c.bf16 %v68, %v67
    %v76 = vpack.c.bf16 %v70, %v69
    %v77 = vpack.c.bf16 %v72, %v71
    %v78 = vpack.c.bf16 %v74, %v73
    %v79 = vld [vmem:[%s1] sm:$0x3]
    %v80 = vld [vmem:[%s3] sm:$0x1]
    %v82 = vlaneseq
    %v83 = vshrl.u32 %v82, 7
    %v84 = vsub.s32 0, %v83
    %v85 = vrot.slane %v80, %v84
    %vm87 = vcmask 31744
    %v89 = vsel %vm87, %v75, 0
    %v92 = vsel %vm87, %v76, 0
    %v95 = vsel %vm87, %v77, 0
    %v98 = vsel %vm87, %v78, 0
    %vm100 = vcmask 1041408
    %v102 = vsel %vm100, %v79, 0
    %104 = vmatprep.subr.bf16.mxu0 0
    %105 = vmatpush1.bf16.msra.mxu0 %v102
    %106 = vmatprep.subr.bf16.mxu0 0
    %107 = vmatpush1.bf16.msra.mxu0 0
    %108 = vmatprep.subr.bf16.mxu0 0
    %109 = vmatpush1.bf16.msra.mxu0 0
    %110 = vmatprep.subr.bf16.mxu0 0
    %111 = vmatpush1.bf16.msra.mxu0 0
    %112 = vmatprep.subr.bf16.mxu0 0
    %113 = vmatpush1.bf16.msra.mxu0 0
    %114 = vmatprep.subr.bf16.mxu0 0
    %115 = vmatpush1.bf16.msra.mxu0 0
    %116 = vmatprep.subr.bf16.mxu0 0
    %117 = vmatpush1.bf16.msra.mxu0 0
    %118 = vmatprep.subr.bf16.mxu0 0
    %119 = vmatpush1.bf16.msra.mxu0 0
    %120 = vmatprep.subr.bf16.mxu0 0
    %121 = vmatpush1.bf16.msra.mxu0 0
    %122 = vmatprep.subr.bf16.mxu0 0
    %123 = vmatpush1.bf16.msra.mxu0 0
    %124 = vmatprep.subr.bf16.mxu0 0
    %125 = vmatpush1.bf16.msra.mxu0 0
    %126 = vmatprep.subr.bf16.mxu0 0
    %127 = vmatpush1.bf16.msra.mxu0 0
    %128 = vmatprep.subr.bf16.mxu0 0
    %129 = vmatpush1.bf16.msra.mxu0 0
    %130 = vmatprep.subr.bf16.mxu0 0
    %131 = vmatpush1.bf16.msra.mxu0 0
    %132 = vmatprep.subr.bf16.mxu0 0
    %133 = vmatpush1.bf16.msra.mxu0 0
    %134 = vmatprep.subr.bf16.mxu0 0
    %135 = vmatpush1.bf16.msra.mxu0 0
    %136 = vmatprep.mubr.bf16.mxu0 0
    %137 = vmatmul.mubr.bf16.gmra.mrb[0].mxu0 %v89
    %v138 = vpop.f32.mrb[0].mxu0
    %v139 = vadd.f32 %v85, %v138
    %v140 = vpop.f32.mrb[0].mxu0
    %v141 = vpop.f32.mrb[0].mxu0
    %v142 = vadd.f32 %v85, %v141
    %v143 = vpop.f32.mrb[0].mxu0
    %144 = vmatprep.mubr.bf16.mxu0 0
    %145 = vmatmul.mubr.bf16.gmra.mrb[0].mxu0 %v92
    %v146 = vpop.f32.mrb[0].mxu0
    %v147 = vadd.f32 %v85, %v146
    %v148 = vpop.f32.mrb[0].mxu0
    %v149 = vpop.f32.mrb[0].mxu0
    %v150 = vadd.f32 %v85, %v149
    %v151 = vpop.f32.mrb[0].mxu0
    %152 = vmatprep.mubr.bf16.mxu0 0
    %153 = vmatmul.mubr.bf16.gmra.mrb[0].mxu0 %v95
    %v154 = vpop.f32.mrb[0].mxu0
    %v155 = vadd.f32 %v85, %v154
    %v156 = vpop.f32.mrb[0].mxu0
    %v157 = vpop.f32.mrb[0].mxu0
    %v158 = vadd.f32 %v85, %v157
    %v159 = vpop.f32.mrb[0].mxu0
    %160 = vmatprep.mubr.bf16.mxu0 0
    %161 = vmatmul.mubr.bf16.gmra.mrb[0].mxu0 %v98
    %v162 = vpop.f32.mrb[0].mxu0
    %v163 = vadd.f32 %v85, %v162
    %v164 = vpop.f32.mrb[0].mxu0
    %v165 = vpop.f32.mrb[0].mxu0
    %v166 = vadd.f32 %v85, %v165
    %v167 = vpop.f32.mrb[0].mxu0
    %168 = vdwg.mxu0
    %v169 = vld [vmem:[%s2] sm:$0xf]
    %v170 = vld [vmem:[%s2 + $0x4] sm:$0xf]
    %v171 = vunpack.c.l.bf16 %v169
    %v172 = vunpack.c.l.bf16 %v170
    %v173 = vld [vmem:[%s4] sm:$0x1]
    %v175 = vlaneseq
    %v176 = vshrl.u32 %v175, 7
    %v177 = vsub.s32 0, %v176
    %v178 = vrot.slane %v173, %v177
    %vm179 = vcmask 130048
    %v181 = vsel %vm179, 0.0, 0
    %183 = vmatprep.subr.mxu0 0.0
    %184 = vmatpush1.msra.mxu0 %v171
    %185 = vmatprep.subr.mxu0 0.0
    %186 = vmatpush1.msra.mxu0 %v172
    %187 = vmatprep.subr.mxu0 0.0
    %188 = vmatpush1.msra.mxu0 0.0
    %189 = vmatprep.subr.mxu0 0.0
    %190 = vmatpush1.msra.mxu0 0.0
    %191 = vmatprep.subr.mxu0 0.0
    %192 = vmatpush1.msra.mxu0 0.0
    %193 = vmatprep.subr.mxu0 0.0
    %194 = vmatpush1.msra.mxu0 0.0
    %195 = vmatprep.subr.mxu0 0.0
    %196 = vmatpush1.msra.mxu0 0.0
    %197 = vmatprep.subr.mxu0 0.0
    %198 = vmatpush1.msra.mxu0 0.0
    %199 = vmatprep.subr.mxu0 0.0
    %200 = vmatpush1.msra.mxu0 0.0
    %201 = vmatprep.subr.mxu0 0.0
    %202 = vmatpush1.msra.mxu0 0.0
    %203 = vmatprep.subr.mxu0 0.0
    %204 = vmatpush1.msra.mxu0 0.0
    %205 = vmatprep.subr.mxu0 0.0
    %206 = vmatpush1.msra.mxu0 0.0
    %207 = vmatprep.subr.mxu0 0.0
    %208 = vmatpush1.msra.mxu0 0.0
    %209 = vmatprep.subr.mxu0 0.0
    %210 = vmatpush1.msra.mxu0 0.0
    %211 = vmatprep.subr.mxu0 0.0
    %212 = vmatpush1.msra.mxu0 0.0
    %213 = vmatprep.subr.mxu0 0.0
    %214 = vmatpush1.msra.mxu0 0.0
    %215 = vmatprep.subr.mxu0 0.0
    %216 = vmatpush1.msra.mxu0 0.0
    %217 = vmatprep.subr.mxu0 0.0
    %218 = vmatpush1.msra.mxu0 0.0
    %219 = vmatprep.subr.mxu0 0.0
    %220 = vmatpush1.msra.mxu0 0.0
    %221 = vmatprep.subr.mxu0 0.0
    %222 = vmatpush1.msra.mxu0 0.0
    %223 = vmatprep.subr.mxu0 0.0
    %224 = vmatpush1.msra.mxu0 0.0
    %225 = vmatprep.subr.mxu0 0.0
    %226 = vmatpush1.msra.mxu0 0.0
    %227 = vmatprep.subr.mxu0 0.0
    %228 = vmatpush1.msra.mxu0 0.0
    %229 = vmatprep.subr.mxu0 0.0
    %230 = vmatpush1.msra.mxu0 0.0
    %231 = vmatprep.subr.mxu0 0.0
    %232 = vmatpush1.msra.mxu0 0.0
    %233 = vmatprep.subr.mxu0 0.0
    %234 = vmatpush1.msra.mxu0 0.0
    %235 = vmatprep.subr.mxu0 0.0
    %236 = vmatpush1.msra.mxu0 0.0
    %237 = vmatprep.subr.mxu0 0.0
    %238 = vmatpush1.msra.mxu0 0.0
    %239 = vmatprep.subr.mxu0 0.0
    %240 = vmatpush1.msra.mxu0 0.0
    %241 = vmatprep.subr.mxu0 0.0
    %242 = vmatpush1.msra.mxu0 0.0
    %243 = vmatprep.subr.mxu0 0.0
    %244 = vmatpush1.msra.mxu0 0.0
    %245 = vmatprep.subr.mxu0 0.0
    %246 = vmatpush1.msra.mxu0 0.0
    %247 = vmatprep.mubr.f32.mxu0 0.0
    %248 = vmatmul.mubr.f32.gmra.mrb[0].mxu0 %v181
    %v249 = vpop.f32.mrb[0].mxu0
    %v250 = vadd.f32 0.0, %v249
    %v251 = vpop.f32.mrb[0].mxu0
    %252 = vdwg.mxu0
    %v253 = vadd.f32 %v139, %v250
    %v254 = vxor.u32 %v253, 2147483648
    %v255 = vmul.f32 %v254, 1.442695
    %v256 = vpow.pop %v255
    %v257 = vadd.f32 %v256, 1.0
    %v258 = vrcp.pop %v257
    %v259 = vmul.f32 1.0, %v258
    %260 = vrot.lane.b32.xlu0 %v178, 32
    %v261 = vpop.permute.xlu0 %260
    %v263 = vadd.f32 %v250, %v261
    %265 = vrot.lane.b32.xlu0 %v263, 96
    %v266 = vpop.permute.xlu0 %265
    %v268 = vmul.f32 %v259, %v266
    %270 = vrot.lane.b32.xlu0 %v268, 32
    %v271 = vpop.permute.xlu0 %270
    %v273 = vadd.f32 %v139, %v271
    %v274 = vtanh.pop %v273
    %v275 = vsub.f32 0.0, %v274
    %277 = vrot.lane.b32.xlu0 %v275, 112
    %v278 = vpop.permute.xlu0 %277
    %v280 = vmul.f32 %v259, %v278
    %282 = vrot.lane.b32.xlu0 %v280, 16
    %v283 = vpop.permute.xlu0 %282
    %v285 = vadd.f32 %v274, %v283
    %287 = vrot.lane.b32.xlu0 %v285, 96
    %v288 = vpop.permute.xlu0 %287
    %v289 = vsel %vm179, %v288, 0
    %291 = vmatprep.subr.mxu0 0.0
    %292 = vmatpush1.msra.mxu0 %v171
    %293 = vmatprep.subr.mxu0 0.0
    %294 = vmatpush1.msra.mxu0 %v172
    %295 = vmatprep.subr.mxu0 0.0
    %296 = vmatpush1.msra.mxu0 0.0
    %297 = vmatprep.subr.mxu0 0.0
    %298 = vmatpush1.msra.mxu0 0.0
    %299 = vmatprep.subr.mxu0 0.0
    %300 = vmatpush1.msra.mxu0 0.0
    %301 = vmatprep.subr.mxu0 0.0
    %302 = vmatpush1.msra.mxu0 0.0
    %303 = vmatprep.subr.mxu0 0.0
    %304 = vmatpush1.msra.mxu0 0.0
    %305 = vmatprep.subr.mxu0 0.0
    %306 = vmatpush1.msra.mxu0 0.0
    %307 = vmatprep.subr.mxu0 0.0
    %308 = vmatpush1.msra.mxu0 0.0
    %309 = vmatprep.subr.mxu0 0.0
    %310 = vmatpush1.msra.mxu0 0.0
    %311 = vmatprep.subr.mxu0 0.0
    %312 = vmatpush1.msra.mxu0 0.0
    %313 = vmatprep.subr.mxu0 0.0
    %314 = vmatpush1.msra.mxu0 0.0
    %315 = vmatprep.subr.mxu0 0.0
    %316 = vmatpush1.msra.mxu0 0.0
    %317 = vmatprep.subr.mxu0 0.0
    %318 = vmatpush1.msra.mxu0 0.0
    %319 = vmatprep.subr.mxu0 0.0
    %320 = vmatpush1.msra.mxu0 0.0
    %321 = vmatprep.subr.mxu0 0.0
    %322 = vmatpush1.msra.mxu0 0.0
    %323 = vmatprep.subr.mxu0 0.0
    %324 = vmatpush1.msra.mxu0 0.0
    %325 = vmatprep.subr.mxu0 0.0
    %326 = vmatpush1.msra.mxu0 0.0
    %327 = vmatprep.subr.mxu0 0.0
    %328 = vmatpush1.msra.mxu0 0.0
    %329 = vmatprep.subr.mxu0 0.0
    %330 = vmatpush1.msra.mxu0 0.0
    %331 = vmatprep.subr.mxu0 0.0
    %332 = vmatpush1.msra.mxu0 0.0
    %333 = vmatprep.subr.mxu0 0.0
    %334 = vmatpush1.msra.mxu0 0.0
    %335 = vmatprep.subr.mxu0 0.0
    %336 = vmatpush1.msra.mxu0 0.0
    %337 = vmatprep.subr.mxu0 0.0
    %338 = vmatpush1.msra.mxu0 0.0
    %339 = vmatprep.subr.mxu0 0.0
    %340 = vmatpush1.msra.mxu0 0.0
    %341 = vmatprep.subr.mxu0 0.0
    %342 = vmatpush1.msra.mxu0 0.0
    %343 = vmatprep.subr.mxu0 0.0
    %344 = vmatpush1.msra.mxu0 0.0
    %345 = vmatprep.subr.mxu0 0.0
    %346 = vmatpush1.msra.mxu0 0.0
    %347 = vmatprep.subr.mxu0 0.0
    %348 = vmatpush1.msra.mxu0 0.0
    %349 = vmatprep.subr.mxu0 0.0
    %350 = vmatpush1.msra.mxu0 0.0
    %351 = vmatprep.subr.mxu0 0.0
    %352 = vmatpush1.msra.mxu0 0.0
    %353 = vmatprep.subr.mxu0 0.0
    %354 = vmatpush1.msra.mxu0 0.0
    %355 = vmatprep.mubr.f32.mxu0 0.0
    %356 = vmatmul.mubr.f32.gmra.mrb[0].mxu0 %v289
    %v357 = vpop.f32.mrb[0].mxu0
    %v358 = vadd.f32 0.0, %v357
    %v359 = vpop.f32.mrb[0].mxu0
    %360 = vdwg.mxu0
    %v361 = vadd.f32 %v142, %v358
    %v362 = vxor.u32 %v361, 2147483648
    %v363 = vmul.f32 %v362, 1.442695
    %v364 = vpow.pop %v363
    %v365 = vadd.f32 %v364, 1.0
    %v366 = vrcp.pop %v365
    %v367 = vmul.f32 1.0, %v366
    %v368 = vadd.f32 %v358, %v261
    %370 = vrot.lane.b32.xlu0 %v368, 96
    %v371 = vpop.permute.xlu0 %370
    %v373 = vmul.f32 %v367, %v371
    %375 = vrot.lane.b32.xlu0 %v373, 32
    %v376 = vpop.permute.xlu0 %375
    %v378 = vadd.f32 %v142, %v376
    %v379 = vtanh.pop %v378
    %v380 = vsub.f32 %v285, %v379
    %382 = vrot.lane.b32.xlu0 %v380, 112
    %v383 = vpop.permute.xlu0 %382
    %v385 = vmul.f32 %v367, %v383
    %387 = vrot.lane.b32.xlu0 %v385, 16
    %v388 = vpop.permute.xlu0 %387
    %v390 = vadd.f32 %v379, %v388
    %392 = vrot.lane.b32.xlu0 %v390, 96
    %v393 = vpop.permute.xlu0 %392
    %v394 = vsel %vm179, %v393, 0
    %396 = vmatprep.subr.mxu0 0.0
    %397 = vmatpush1.msra.mxu0 %v171
    %398 = vmatprep.subr.mxu0 0.0
    %399 = vmatpush1.msra.mxu0 %v172
    %400 = vmatprep.subr.mxu0 0.0
    %401 = vmatpush1.msra.mxu0 0.0
    %402 = vmatprep.subr.mxu0 0.0
    %403 = vmatpush1.msra.mxu0 0.0
    %404 = vmatprep.subr.mxu0 0.0
    %405 = vmatpush1.msra.mxu0 0.0
    %406 = vmatprep.subr.mxu0 0.0
    %407 = vmatpush1.msra.mxu0 0.0
    %408 = vmatprep.subr.mxu0 0.0
    %409 = vmatpush1.msra.mxu0 0.0
    %410 = vmatprep.subr.mxu0 0.0
    %411 = vmatpush1.msra.mxu0 0.0
    %412 = vmatprep.subr.mxu0 0.0
    %413 = vmatpush1.msra.mxu0 0.0
    %414 = vmatprep.subr.mxu0 0.0
    %415 = vmatpush1.msra.mxu0 0.0
    %416 = vmatprep.subr.mxu0 0.0
    %417 = vmatpush1.msra.mxu0 0.0
    %418 = vmatprep.subr.mxu0 0.0
    %419 = vmatpush1.msra.mxu0 0.0
    %420 = vmatprep.subr.mxu0 0.0
    %421 = vmatpush1.msra.mxu0 0.0
    %422 = vmatprep.subr.mxu0 0.0
    %423 = vmatpush1.msra.mxu0 0.0
    %424 = vmatprep.subr.mxu0 0.0
    %425 = vmatpush1.msra.mxu0 0.0
    %426 = vmatprep.subr.mxu0 0.0
    %427 = vmatpush1.msra.mxu0 0.0
    %428 = vmatprep.subr.mxu0 0.0
    %429 = vmatpush1.msra.mxu0 0.0
    %430 = vmatprep.subr.mxu0 0.0
    %431 = vmatpush1.msra.mxu0 0.0
    %432 = vmatprep.subr.mxu0 0.0
    %433 = vmatpush1.msra.mxu0 0.0
    %434 = vmatprep.subr.mxu0 0.0
    %435 = vmatpush1.msra.mxu0 0.0
    %436 = vmatprep.subr.mxu0 0.0
    %437 = vmatpush1.msra.mxu0 0.0
    %438 = vmatprep.subr.mxu0 0.0
    %439 = vmatpush1.msra.mxu0 0.0
    %440 = vmatprep.subr.mxu0 0.0
    %441 = vmatpush1.msra.mxu0 0.0
    %442 = vmatprep.subr.mxu0 0.0
    %443 = vmatpush1.msra.mxu0 0.0
    %444 = vmatprep.subr.mxu0 0.0
    %445 = vmatpush1.msra.mxu0 0.0
    %446 = vmatprep.subr.mxu0 0.0
    %447 = vmatpush1.msra.mxu0 0.0
    %448 = vmatprep.subr.mxu0 0.0
    %449 = vmatpush1.msra.mxu0 0.0
    %450 = vmatprep.subr.mxu0 0.0
    %451 = vmatpush1.msra.mxu0 0.0
    %452 = vmatprep.subr.mxu0 0.0
    %453 = vmatpush1.msra.mxu0 0.0
    %454 = vmatprep.subr.mxu0 0.0
    %455 = vmatpush1.msra.mxu0 0.0
    %456 = vmatprep.subr.mxu0 0.0
    %457 = vmatpush1.msra.mxu0 0.0
    %458 = vmatprep.subr.mxu0 0.0
    %459 = vmatpush1.msra.mxu0 0.0
    %460 = vmatprep.mubr.f32.mxu0 0.0
    %461 = vmatmul.mubr.f32.gmra.mrb[0].mxu0 %v394
    %v462 = vpop.f32.mrb[0].mxu0
    %v463 = vadd.f32 0.0, %v462
    %v464 = vpop.f32.mrb[0].mxu0
    %465 = vdwg.mxu0
    %v466 = vadd.f32 %v147, %v463
    %v467 = vxor.u32 %v466, 2147483648
    %v468 = vmul.f32 %v467, 1.442695
    %v469 = vpow.pop %v468
    %v470 = vadd.f32 %v469, 1.0
    %v471 = vrcp.pop %v470
    %v472 = vmul.f32 1.0, %v471
    %v473 = vadd.f32 %v463, %v261
    %475 = vrot.lane.b32.xlu0 %v473, 96
    %v476 = vpop.permute.xlu0 %475
    %v478 = vmul.f32 %v472, %v476
    %480 = vrot.lane.b32.xlu0 %v478, 32
    %v481 = vpop.permute.xlu0 %480
    %v483 = vadd.f32 %v147, %v481
    %v484 = vtanh.pop %v483
    %v485 = vsub.f32 %v390, %v484
    %487 = vrot.lane.b32.xlu0 %v485, 112
    %v488 = vpop.permute.xlu0 %487
    %v490 = vmul.f32 %v472, %v488
    %492 = vrot.lane.b32.xlu0 %v490, 16
    %v493 = vpop.permute.xlu0 %492
    %v495 = vadd.f32 %v484, %v493
    %497 = vrot.lane.b32.xlu0 %v495, 96
    %v498 = vpop.permute.xlu0 %497
    %v499 = vsel %vm179, %v498, 0
    %501 = vmatprep.subr.mxu0 0.0
    %502 = vmatpush1.msra.mxu0 %v171
    %503 = vmatprep.subr.mxu0 0.0
    %504 = vmatpush1.msra.mxu0 %v172
    %505 = vmatprep.subr.mxu0 0.0
    %506 = vmatpush1.msra.mxu0 0.0
    %507 = vmatprep.subr.mxu0 0.0
    %508 = vmatpush1.msra.mxu0 0.0
    %509 = vmatprep.subr.mxu0 0.0
    %510 = vmatpush1.msra.mxu0 0.0
    %511 = vmatprep.subr.mxu0 0.0
    %512 = vmatpush1.msra.mxu0 0.0
    %513 = vmatprep.subr.mxu0 0.0
    %514 = vmatpush1.msra.mxu0 0.0
    %515 = vmatprep.subr.mxu0 0.0
    %516 = vmatpush1.msra.mxu0 0.0
    %517 = vmatprep.subr.mxu0 0.0
    %518 = vmatpush1.msra.mxu0 0.0
    %519 = vmatprep.subr.mxu0 0.0
    %520 = vmatpush1.msra.mxu0 0.0
    %521 = vmatprep.subr.mxu0 0.0
    %522 = vmatpush1.msra.mxu0 0.0
    %523 = vmatprep.subr.mxu0 0.0
    %524 = vmatpush1.msra.mxu0 0.0
    %525 = vmatprep.subr.mxu0 0.0
    %526 = vmatpush1.msra.mxu0 0.0
    %527 = vmatprep.subr.mxu0 0.0
    %528 = vmatpush1.msra.mxu0 0.0
    %529 = vmatprep.subr.mxu0 0.0
    %530 = vmatpush1.msra.mxu0 0.0
    %531 = vmatprep.subr.mxu0 0.0
    %532 = vmatpush1.msra.mxu0 0.0
    %533 = vmatprep.subr.mxu0 0.0
    %534 = vmatpush1.msra.mxu0 0.0
    %535 = vmatprep.subr.mxu0 0.0
    %536 = vmatpush1.msra.mxu0 0.0
    %537 = vmatprep.subr.mxu0 0.0
    %538 = vmatpush1.msra.mxu0 0.0
    %539 = vmatprep.subr.mxu0 0.0
    %540 = vmatpush1.msra.mxu0 0.0
    %541 = vmatprep.subr.mxu0 0.0
    %542 = vmatpush1.msra.mxu0 0.0
    %543 = vmatprep.subr.mxu0 0.0
    %544 = vmatpush1.msra.mxu0 0.0
    %545 = vmatprep.subr.mxu0 0.0
    %546 = vmatpush1.msra.mxu0 0.0
    %547 = vmatprep.subr.mxu0 0.0
    %548 = vmatpush1.msra.mxu0 0.0
    %549 = vmatprep.subr.mxu0 0.0
    %550 = vmatpush1.msra.mxu0 0.0
    %551 = vmatprep.subr.mxu0 0.0
    %552 = vmatpush1.msra.mxu0 0.0
    %553 = vmatprep.subr.mxu0 0.0
    %554 = vmatpush1.msra.mxu0 0.0
    %555 = vmatprep.subr.mxu0 0.0
    %556 = vmatpush1.msra.mxu0 0.0
    %557 = vmatprep.subr.mxu0 0.0
    %558 = vmatpush1.msra.mxu0 0.0
    %559 = vmatprep.subr.mxu0 0.0
    %560 = vmatpush1.msra.mxu0 0.0
    %561 = vmatprep.subr.mxu0 0.0
    %562 = vmatpush1.msra.mxu0 0.0
    %563 = vmatprep.subr.mxu0 0.0
    %564 = vmatpush1.msra.mxu0 0.0
    %565 = vmatprep.mubr.f32.mxu0 0.0
    %566 = vmatmul.mubr.f32.gmra.mrb[0].mxu0 %v499
    %v567 = vpop.f32.mrb[0].mxu0
    %v568 = vadd.f32 0.0, %v567
    %v569 = vpop.f32.mrb[0].mxu0
    %570 = vdwg.mxu0
    %v571 = vadd.f32 %v150, %v568
    %v572 = vxor.u32 %v571, 2147483648
    %v573 = vmul.f32 %v572, 1.442695
    %v574 = vpow.pop %v573
    %v575 = vadd.f32 %v574, 1.0
    %v576 = vrcp.pop %v575
    %v577 = vmul.f32 1.0, %v576
    %v578 = vadd.f32 %v568, %v261
    %580 = vrot.lane.b32.xlu0 %v578, 96
    %v581 = vpop.permute.xlu0 %580
    %v583 = vmul.f32 %v577, %v581
    %585 = vrot.lane.b32.xlu0 %v583, 32
    %v586 = vpop.permute.xlu0 %585
    %v588 = vadd.f32 %v150, %v586
    %v589 = vtanh.pop %v588
    %v590 = vsub.f32 %v495, %v589
    %592 = vrot.lane.b32.xlu0 %v590, 112
    %v593 = vpop.permute.xlu0 %592
    %v595 = vmul.f32 %v577, %v593
    %597 = vrot.lane.b32.xlu0 %v595, 16
    %v598 = vpop.permute.xlu0 %597
    %v600 = vadd.f32 %v589, %v598
    %602 = vrot.lane.b32.xlu0 %v600, 96
    %v603 = vpop.permute.xlu0 %602
    %v604 = vsel %vm179, %v603, 0
    %606 = vmatprep.subr.mxu0 0.0
    %607 = vmatpush1.msra.mxu0 %v171
    %608 = vmatprep.subr.mxu0 0.0
    %609 = vmatpush1.msra.mxu0 %v172
    %610 = vmatprep.subr.mxu0 0.0
    %611 = vmatpush1.msra.mxu0 0.0
    %612 = vmatprep.subr.mxu0 0.0
    %613 = vmatpush1.msra.mxu0 0.0
    %614 = vmatprep.subr.mxu0 0.0
    %615 = vmatpush1.msra.mxu0 0.0
    %616 = vmatprep.subr.mxu0 0.0
    %617 = vmatpush1.msra.mxu0 0.0
    %618 = vmatprep.subr.mxu0 0.0
    %619 = vmatpush1.msra.mxu0 0.0
    %620 = vmatprep.subr.mxu0 0.0
    %621 = vmatpush1.msra.mxu0 0.0
    %622 = vmatprep.subr.mxu0 0.0
    %623 = vmatpush1.msra.mxu0 0.0
    %624 = vmatprep.subr.mxu0 0.0
    %625 = vmatpush1.msra.mxu0 0.0
    %626 = vmatprep.subr.mxu0 0.0
    %627 = vmatpush1.msra.mxu0 0.0
    %628 = vmatprep.subr.mxu0 0.0
    %629 = vmatpush1.msra.mxu0 0.0
    %630 = vmatprep.subr.mxu0 0.0
    %631 = vmatpush1.msra.mxu0 0.0
    %632 = vmatprep.subr.mxu0 0.0
    %633 = vmatpush1.msra.mxu0 0.0
    %634 = vmatprep.subr.mxu0 0.0
    %635 = vmatpush1.msra.mxu0 0.0
    %636 = vmatprep.subr.mxu0 0.0
    %637 = vmatpush1.msra.mxu0 0.0
    %638 = vmatprep.subr.mxu0 0.0
    %639 = vmatpush1.msra.mxu0 0.0
    %640 = vmatprep.subr.mxu0 0.0
    %641 = vmatpush1.msra.mxu0 0.0
    %642 = vmatprep.subr.mxu0 0.0
    %643 = vmatpush1.msra.mxu0 0.0
    %644 = vmatprep.subr.mxu0 0.0
    %645 = vmatpush1.msra.mxu0 0.0
    %646 = vmatprep.subr.mxu0 0.0
    %647 = vmatpush1.msra.mxu0 0.0
    %648 = vmatprep.subr.mxu0 0.0
    %649 = vmatpush1.msra.mxu0 0.0
    %650 = vmatprep.subr.mxu0 0.0
    %651 = vmatpush1.msra.mxu0 0.0
    %652 = vmatprep.subr.mxu0 0.0
    %653 = vmatpush1.msra.mxu0 0.0
    %654 = vmatprep.subr.mxu0 0.0
    %655 = vmatpush1.msra.mxu0 0.0
    %656 = vmatprep.subr.mxu0 0.0
    %657 = vmatpush1.msra.mxu0 0.0
    %658 = vmatprep.subr.mxu0 0.0
    %659 = vmatpush1.msra.mxu0 0.0
    %660 = vmatprep.subr.mxu0 0.0
    %661 = vmatpush1.msra.mxu0 0.0
    %662 = vmatprep.subr.mxu0 0.0
    %663 = vmatpush1.msra.mxu0 0.0
    %664 = vmatprep.subr.mxu0 0.0
    %665 = vmatpush1.msra.mxu0 0.0
    %666 = vmatprep.subr.mxu0 0.0
    %667 = vmatpush1.msra.mxu0 0.0
    %668 = vmatprep.subr.mxu0 0.0
    %669 = vmatpush1.msra.mxu0 0.0
    %670 = vmatprep.mubr.f32.mxu0 0.0
    %671 = vmatmul.mubr.f32.gmra.mrb[0].mxu0 %v604
    %v672 = vpop.f32.mrb[0].mxu0
    %v673 = vadd.f32 0.0, %v672
    %v674 = vpop.f32.mrb[0].mxu0
    %675 = vdwg.mxu0
    %v676 = vadd.f32 %v155, %v673
    %v677 = vxor.u32 %v676, 2147483648
    %v678 = vmul.f32 %v677, 1.442695
    %v679 = vpow.pop %v678
    %v680 = vadd.f32 %v679, 1.0
    %v681 = vrcp.pop %v680
    %v682 = vmul.f32 1.0, %v681
    %v683 = vadd.f32 %v673, %v261
    %685 = vrot.lane.b32.xlu0 %v683, 96
    %v686 = vpop.permute.xlu0 %685
    %v688 = vmul.f32 %v682, %v686
    %690 = vrot.lane.b32.xlu0 %v688, 32
    %v691 = vpop.permute.xlu0 %690
    %v693 = vadd.f32 %v155, %v691
    %v694 = vtanh.pop %v693
    %v695 = vsub.f32 %v600, %v694
    %697 = vrot.lane.b32.xlu0 %v695, 112
    %v698 = vpop.permute.xlu0 %697
    %v700 = vmul.f32 %v682, %v698
    %702 = vrot.lane.b32.xlu0 %v700, 16
    %v703 = vpop.permute.xlu0 %702
    %v705 = vadd.f32 %v694, %v703
    %707 = vrot.lane.b32.xlu0 %v705, 96
    %v708 = vpop.permute.xlu0 %707
    %v709 = vsel %vm179, %v708, 0
    %711 = vmatprep.subr.mxu0 0.0
    %712 = vmatpush1.msra.mxu0 %v171
    %713 = vmatprep.subr.mxu0 0.0
    %714 = vmatpush1.msra.mxu0 %v172
    %715 = vmatprep.subr.mxu0 0.0
    %716 = vmatpush1.msra.mxu0 0.0
    %717 = vmatprep.subr.mxu0 0.0
    %718 = vmatpush1.msra.mxu0 0.0
    %719 = vmatprep.subr.mxu0 0.0
    %720 = vmatpush1.msra.mxu0 0.0
    %721 = vmatprep.subr.mxu0 0.0
    %722 = vmatpush1.msra.mxu0 0.0
    %723 = vmatprep.subr.mxu0 0.0
    %724 = vmatpush1.msra.mxu0 0.0
    %725 = vmatprep.subr.mxu0 0.0
    %726 = vmatpush1.msra.mxu0 0.0
    %727 = vmatprep.subr.mxu0 0.0
    %728 = vmatpush1.msra.mxu0 0.0
    %729 = vmatprep.subr.mxu0 0.0
    %730 = vmatpush1.msra.mxu0 0.0
    %731 = vmatprep.subr.mxu0 0.0
    %732 = vmatpush1.msra.mxu0 0.0
    %733 = vmatprep.subr.mxu0 0.0
    %734 = vmatpush1.msra.mxu0 0.0
    %735 = vmatprep.subr.mxu0 0.0
    %736 = vmatpush1.msra.mxu0 0.0
    %737 = vmatprep.subr.mxu0 0.0
    %738 = vmatpush1.msra.mxu0 0.0
    %739 = vmatprep.subr.mxu0 0.0
    %740 = vmatpush1.msra.mxu0 0.0
    %741 = vmatprep.subr.mxu0 0.0
    %742 = vmatpush1.msra.mxu0 0.0
    %743 = vmatprep.subr.mxu0 0.0
    %744 = vmatpush1.msra.mxu0 0.0
    %745 = vmatprep.subr.mxu0 0.0
    %746 = vmatpush1.msra.mxu0 0.0
    %747 = vmatprep.subr.mxu0 0.0
    %748 = vmatpush1.msra.mxu0 0.0
    %749 = vmatprep.subr.mxu0 0.0
    %750 = vmatpush1.msra.mxu0 0.0
    %751 = vmatprep.subr.mxu0 0.0
    %752 = vmatpush1.msra.mxu0 0.0
    %753 = vmatprep.subr.mxu0 0.0
    %754 = vmatpush1.msra.mxu0 0.0
    %755 = vmatprep.subr.mxu0 0.0
    %756 = vmatpush1.msra.mxu0 0.0
    %757 = vmatprep.subr.mxu0 0.0
    %758 = vmatpush1.msra.mxu0 0.0
    %759 = vmatprep.subr.mxu0 0.0
    %760 = vmatpush1.msra.mxu0 0.0
    %761 = vmatprep.subr.mxu0 0.0
    %762 = vmatpush1.msra.mxu0 0.0
    %763 = vmatprep.subr.mxu0 0.0
    %764 = vmatpush1.msra.mxu0 0.0
    %765 = vmatprep.subr.mxu0 0.0
    %766 = vmatpush1.msra.mxu0 0.0
    %767 = vmatprep.subr.mxu0 0.0
    %768 = vmatpush1.msra.mxu0 0.0
    %769 = vmatprep.subr.mxu0 0.0
    %770 = vmatpush1.msra.mxu0 0.0
    %771 = vmatprep.subr.mxu0 0.0
    %772 = vmatpush1.msra.mxu0 0.0
    %773 = vmatprep.subr.mxu0 0.0
    %774 = vmatpush1.msra.mxu0 0.0
    %775 = vmatprep.mubr.f32.mxu0 0.0
    %776 = vmatmul.mubr.f32.gmra.mrb[0].mxu0 %v709
    %v777 = vpop.f32.mrb[0].mxu0
    %v778 = vadd.f32 0.0, %v777
    %v779 = vpop.f32.mrb[0].mxu0
    %780 = vdwg.mxu0
    %v781 = vadd.f32 %v158, %v778
    %v782 = vxor.u32 %v781, 2147483648
    %v783 = vmul.f32 %v782, 1.442695
    %v784 = vpow.pop %v783
    %v785 = vadd.f32 %v784, 1.0
    %v786 = vrcp.pop %v785
    %v787 = vmul.f32 1.0, %v786
    %v788 = vadd.f32 %v778, %v261
    %790 = vrot.lane.b32.xlu0 %v788, 96
    %v791 = vpop.permute.xlu0 %790
    %v793 = vmul.f32 %v787, %v791
    %795 = vrot.lane.b32.xlu0 %v793, 32
    %v796 = vpop.permute.xlu0 %795
    %v798 = vadd.f32 %v158, %v796
    %v799 = vtanh.pop %v798
    %v800 = vsub.f32 %v705, %v799
    %802 = vrot.lane.b32.xlu0 %v800, 112
    %v803 = vpop.permute.xlu0 %802
    %v805 = vmul.f32 %v787, %v803
    %807 = vrot.lane.b32.xlu0 %v805, 16
    %v808 = vpop.permute.xlu0 %807
    %v810 = vadd.f32 %v799, %v808
    %812 = vrot.lane.b32.xlu0 %v810, 96
    %v813 = vpop.permute.xlu0 %812
    %v814 = vsel %vm179, %v813, 0
    %816 = vmatprep.subr.mxu0 0.0
    %817 = vmatpush1.msra.mxu0 %v171
    %818 = vmatprep.subr.mxu0 0.0
    %819 = vmatpush1.msra.mxu0 %v172
    %820 = vmatprep.subr.mxu0 0.0
    %821 = vmatpush1.msra.mxu0 0.0
    %822 = vmatprep.subr.mxu0 0.0
    %823 = vmatpush1.msra.mxu0 0.0
    %824 = vmatprep.subr.mxu0 0.0
    %825 = vmatpush1.msra.mxu0 0.0
    %826 = vmatprep.subr.mxu0 0.0
    %827 = vmatpush1.msra.mxu0 0.0
    %828 = vmatprep.subr.mxu0 0.0
    %829 = vmatpush1.msra.mxu0 0.0
    %830 = vmatprep.subr.mxu0 0.0
    %831 = vmatpush1.msra.mxu0 0.0
    %832 = vmatprep.subr.mxu0 0.0
    %833 = vmatpush1.msra.mxu0 0.0
    %834 = vmatprep.subr.mxu0 0.0
    %835 = vmatpush1.msra.mxu0 0.0
    %836 = vmatprep.subr.mxu0 0.0
    %837 = vmatpush1.msra.mxu0 0.0
    %838 = vmatprep.subr.mxu0 0.0
    %839 = vmatpush1.msra.mxu0 0.0
    %840 = vmatprep.subr.mxu0 0.0
    %841 = vmatpush1.msra.mxu0 0.0
    %842 = vmatprep.subr.mxu0 0.0
    %843 = vmatpush1.msra.mxu0 0.0
    %844 = vmatprep.subr.mxu0 0.0
    %845 = vmatpush1.msra.mxu0 0.0
    %846 = vmatprep.subr.mxu0 0.0
    %847 = vmatpush1.msra.mxu0 0.0
    %848 = vmatprep.subr.mxu0 0.0
    %849 = vmatpush1.msra.mxu0 0.0
    %850 = vmatprep.subr.mxu0 0.0
    %851 = vmatpush1.msra.mxu0 0.0
    %852 = vmatprep.subr.mxu0 0.0
    %853 = vmatpush1.msra.mxu0 0.0
    %854 = vmatprep.subr.mxu0 0.0
    %855 = vmatpush1.msra.mxu0 0.0
    %856 = vmatprep.subr.mxu0 0.0
    %857 = vmatpush1.msra.mxu0 0.0
    %858 = vmatprep.subr.mxu0 0.0
    %859 = vmatpush1.msra.mxu0 0.0
    %860 = vmatprep.subr.mxu0 0.0
    %861 = vmatpush1.msra.mxu0 0.0
    %862 = vmatprep.subr.mxu0 0.0
    %863 = vmatpush1.msra.mxu0 0.0
    %864 = vmatprep.subr.mxu0 0.0
    %865 = vmatpush1.msra.mxu0 0.0
    %866 = vmatprep.subr.mxu0 0.0
    %867 = vmatpush1.msra.mxu0 0.0
    %868 = vmatprep.subr.mxu0 0.0
    %869 = vmatpush1.msra.mxu0 0.0
    %870 = vmatprep.subr.mxu0 0.0
    %871 = vmatpush1.msra.mxu0 0.0
    %872 = vmatprep.subr.mxu0 0.0
    %873 = vmatpush1.msra.mxu0 0.0
    %874 = vmatprep.subr.mxu0 0.0
    %875 = vmatpush1.msra.mxu0 0.0
    %876 = vmatprep.subr.mxu0 0.0
    %877 = vmatpush1.msra.mxu0 0.0
    %878 = vmatprep.subr.mxu0 0.0
    %879 = vmatpush1.msra.mxu0 0.0
    %880 = vmatprep.mubr.f32.mxu0 0.0
    %881 = vmatmul.mubr.f32.gmra.mrb[0].mxu0 %v814
    %v882 = vpop.f32.mrb[0].mxu0
    %v883 = vadd.f32 0.0, %v882
    %v884 = vpop.f32.mrb[0].mxu0
    %885 = vdwg.mxu0
    %v886 = vadd.f32 %v163, %v883
    %v887 = vxor.u32 %v886, 2147483648
    %v888 = vmul.f32 %v887, 1.442695
    %v889 = vpow.pop %v888
    %v890 = vadd.f32 %v889, 1.0
    %v891 = vrcp.pop %v890
    %v892 = vmul.f32 1.0, %v891
    %v893 = vadd.f32 %v883, %v261
    %895 = vrot.lane.b32.xlu0 %v893, 96
    %v896 = vpop.permute.xlu0 %895
    %v898 = vmul.f32 %v892, %v896
    %900 = vrot.lane.b32.xlu0 %v898, 32
    %v901 = vpop.permute.xlu0 %900
    %v903 = vadd.f32 %v163, %v901
    %v904 = vtanh.pop %v903
    %v905 = vsub.f32 %v810, %v904
    %907 = vrot.lane.b32.xlu0 %v905, 112
    %v908 = vpop.permute.xlu0 %907
    %v910 = vmul.f32 %v892, %v908
    %912 = vrot.lane.b32.xlu0 %v910, 16
    %v913 = vpop.permute.xlu0 %912
    %v915 = vadd.f32 %v904, %v913
    %917 = vrot.lane.b32.xlu0 %v915, 96
    %v918 = vpop.permute.xlu0 %917
    %v919 = vsel %vm179, %v918, 0
    %921 = vmatprep.subr.mxu0 0.0
    %922 = vmatpush1.msra.mxu0 %v171
    %923 = vmatprep.subr.mxu0 0.0
    %924 = vmatpush1.msra.mxu0 %v172
    %925 = vmatprep.subr.mxu0 0.0
    %926 = vmatpush1.msra.mxu0 0.0
    %927 = vmatprep.subr.mxu0 0.0
    %928 = vmatpush1.msra.mxu0 0.0
    %929 = vmatprep.subr.mxu0 0.0
    %930 = vmatpush1.msra.mxu0 0.0
    %931 = vmatprep.subr.mxu0 0.0
    %932 = vmatpush1.msra.mxu0 0.0
    %933 = vmatprep.subr.mxu0 0.0
    %934 = vmatpush1.msra.mxu0 0.0
    %935 = vmatprep.subr.mxu0 0.0
    %936 = vmatpush1.msra.mxu0 0.0
    %937 = vmatprep.subr.mxu0 0.0
    %938 = vmatpush1.msra.mxu0 0.0
    %939 = vmatprep.subr.mxu0 0.0
    %940 = vmatpush1.msra.mxu0 0.0
    %941 = vmatprep.subr.mxu0 0.0
    %942 = vmatpush1.msra.mxu0 0.0
    %943 = vmatprep.subr.mxu0 0.0
    %944 = vmatpush1.msra.mxu0 0.0
    %945 = vmatprep.subr.mxu0 0.0
    %946 = vmatpush1.msra.mxu0 0.0
    %947 = vmatprep.subr.mxu0 0.0
    %948 = vmatpush1.msra.mxu0 0.0
    %949 = vmatprep.subr.mxu0 0.0
    %950 = vmatpush1.msra.mxu0 0.0
    %951 = vmatprep.subr.mxu0 0.0
    %952 = vmatpush1.msra.mxu0 0.0
    %953 = vmatprep.subr.mxu0 0.0
    %954 = vmatpush1.msra.mxu0 0.0
    %955 = vmatprep.subr.mxu0 0.0
    %956 = vmatpush1.msra.mxu0 0.0
    %957 = vmatprep.subr.mxu0 0.0
    %958 = vmatpush1.msra.mxu0 0.0
    %959 = vmatprep.subr.mxu0 0.0
    %960 = vmatpush1.msra.mxu0 0.0
    %961 = vmatprep.subr.mxu0 0.0
    %962 = vmatpush1.msra.mxu0 0.0
    %963 = vmatprep.subr.mxu0 0.0
    %964 = vmatpush1.msra.mxu0 0.0
    %965 = vmatprep.subr.mxu0 0.0
    %966 = vmatpush1.msra.mxu0 0.0
    %967 = vmatprep.subr.mxu0 0.0
    %968 = vmatpush1.msra.mxu0 0.0
    %969 = vmatprep.subr.mxu0 0.0
    %970 = vmatpush1.msra.mxu0 0.0
    %971 = vmatprep.subr.mxu0 0.0
    %972 = vmatpush1.msra.mxu0 0.0
    %973 = vmatprep.subr.mxu0 0.0
    %974 = vmatpush1.msra.mxu0 0.0
    %975 = vmatprep.subr.mxu0 0.0
    %976 = vmatpush1.msra.mxu0 0.0
    %977 = vmatprep.subr.mxu0 0.0
    %978 = vmatpush1.msra.mxu0 0.0
    %979 = vmatprep.subr.mxu0 0.0
    %980 = vmatpush1.msra.mxu0 0.0
    %981 = vmatprep.subr.mxu0 0.0
    %982 = vmatpush1.msra.mxu0 0.0
    %983 = vmatprep.subr.mxu0 0.0
    %984 = vmatpush1.msra.mxu0 0.0
    %985 = vmatprep.mubr.f32.mxu0 0.0
    %986 = vmatmul.mubr.f32.gmra.mrb[0].mxu0 %v919
    %v987 = vpop.f32.mrb[0].mxu0
    %v988 = vadd.f32 0.0, %v987
    %v989 = vpop.f32.mrb[0].mxu0
    %990 = vdwg.mxu0
    %v991 = vadd.f32 %v166, %v988
    %v992 = vxor.u32 %v991, 2147483648
    %v993 = vmul.f32 %v992, 1.442695
    %v994 = vpow.pop %v993
    %v995 = vadd.f32 %v994, 1.0
    %v996 = vrcp.pop %v995
    %v997 = vmul.f32 1.0, %v996
    %v998 = vadd.f32 %v988, %v261
    %1000 = vrot.lane.b32.xlu0 %v998, 96
    %v1001 = vpop.permute.xlu0 %1000
    %v1003 = vmul.f32 %v997, %v1001
    %1005 = vrot.lane.b32.xlu0 %v1003, 32
    %v1006 = vpop.permute.xlu0 %1005
    %v1008 = vadd.f32 %v166, %v1006
    %v1009 = vtanh.pop %v1008
    %v1010 = vsub.f32 %v915, %v1009
    %1012 = vrot.lane.b32.xlu0 %v1010, 112
    %v1013 = vpop.permute.xlu0 %1012
    %v1015 = vmul.f32 %v997, %v1013
    %1017 = vrot.lane.b32.xlu0 %v1015, 16
    %v1018 = vpop.permute.xlu0 %1017
    %v1020 = vadd.f32 %v1009, %v1018
    %v1021 = vpack.c.bf16 %v1020, %v1020
    %v1022 = vld [vmem:[%s5] sm:$0xff]
    %v1023 = vld [vmem:[%s5 + $0x8] sm:$0xf]
    %v1024 = vld [vmem:[%s5 + $0xc] sm:$0xff]
    %v1025 = vld [vmem:[%s5 + $0x14] sm:$0xf]
    %v1026 = vld [vmem:[%s6] sm:$0x7]
    %v1028 = vlaneseq
    %v1029 = vshrl.u32 %v1028, 7
    %v1030 = vsub.s32 0, %v1029
    %v1031 = vrot.slane %v1026, %v1030
    %v1032 = vlaneseq
    %v1033 = vshrl.u32 %v1032, 7
    %v1034 = vsub.s32 1, %v1033
    %v1035 = vrot.slane %v1026, %v1034
    %v1036 = vlaneseq
    %v1037 = vshrl.u32 %v1036, 7
    %v1038 = vsub.s32 2, %v1037
    %v1039 = vrot.slane %v1026, %v1038
    %1044 = vrot.lane.b32.xlu0 %v1021, 96
    %v1045 = vpop.permute.xlu0 %1044
    %v1050 = vunpack.c.l.b16 %v1022
    %v1051 = vunpack.c.h.b16 %v1022
    %v1052 = vunpack.c.l.b16 %v1023
    %v1053 = vunpack.c.l.b16 %v1024
    %v1054 = vunpack.c.h.b16 %v1024
    %v1055 = vunpack.c.l.b16 %v1025
    %v1056 = vpack.c.b16 %v1053, %v1050
    %v1057 = vpack.c.b16 %v1054, %v1051
    %v1058 = vpack.c.b16 %v1055, %v1052
    %v1063 = vsel %vm179, %v1045, 0
    %1065 = vmatprep.subr.bf16.mxu0 %v1057
    %1066 = vmatpush1.bf16.msra.mxu0 %v1056
    %1067 = vmatprep.subr.bf16.mxu0 0
    %1068 = vmatpush1.bf16.msra.mxu0 0
    %1069 = vmatprep.subr.bf16.mxu0 0
    %1070 = vmatpush1.bf16.msra.mxu0 0
    %1071 = vmatprep.subr.bf16.mxu0 0
    %1072 = vmatpush1.bf16.msra.mxu0 0
    %1073 = vmatprep.subr.bf16.mxu0 0
    %1074 = vmatpush1.bf16.msra.mxu0 0
    %1075 = vmatprep.subr.bf16.mxu0 0
    %1076 = vmatpush1.bf16.msra.mxu0 0
    %1077 = vmatprep.subr.bf16.mxu0 0
    %1078 = vmatpush1.bf16.msra.mxu0 0
    %1079 = vmatprep.subr.bf16.mxu0 0
    %1080 = vmatpush1.bf16.msra.mxu0 0
    %1081 = vmatprep.subr.bf16.mxu0 0
    %1082 = vmatpush1.bf16.msra.mxu0 0
    %1083 = vmatprep.subr.bf16.mxu0 0
    %1084 = vmatpush1.bf16.msra.mxu0 0
    %1085 = vmatprep.subr.bf16.mxu0 0
    %1086 = vmatpush1.bf16.msra.mxu0 0
    %1087 = vmatprep.subr.bf16.mxu0 0
    %1088 = vmatpush1.bf16.msra.mxu0 0
    %1089 = vmatprep.subr.bf16.mxu0 0
    %1090 = vmatpush1.bf16.msra.mxu0 0
    %1091 = vmatprep.subr.bf16.mxu0 0
    %1092 = vmatpush1.bf16.msra.mxu0 0
    %1093 = vmatprep.subr.bf16.mxu0 0
    %1094 = vmatpush1.bf16.msra.mxu0 0
    %1095 = vmatprep.subr.bf16.mxu0 0
    %1096 = vmatpush1.bf16.msra.mxu0 0
    %1097 = vmatprep.mubr.bf16.mxu0 0
    %1098 = vmatmul.mubr.bf16.gmra.mrb[0].mxu0 %v1063
    %v1099 = vpop.f32.mrb[0].mxu0
    %v1100 = vadd.f32 %v1031, %v1099
    %v1101 = vpop.f32.mrb[0].mxu0
    %v1102 = vadd.f32 %v1035, %v1101
    %v1103 = vpop.f32.mrb[0].mxu0
    %v1104 = vpop.f32.mrb[0].mxu0
    %1105 = vdwg.mxu0
    %1106 = vmatprep.subr.bf16.mxu0 0
    %1107 = vmatpush1.bf16.msra.mxu0 %v1058
    %1108 = vmatprep.subr.bf16.mxu0 0
    %1109 = vmatpush1.bf16.msra.mxu0 0
    %1110 = vmatprep.subr.bf16.mxu0 0
    %1111 = vmatpush1.bf16.msra.mxu0 0
    %1112 = vmatprep.subr.bf16.mxu0 0
    %1113 = vmatpush1.bf16.msra.mxu0 0
    %1114 = vmatprep.subr.bf16.mxu0 0
    %1115 = vmatpush1.bf16.msra.mxu0 0
    %1116 = vmatprep.subr.bf16.mxu0 0
    %1117 = vmatpush1.bf16.msra.mxu0 0
    %1118 = vmatprep.subr.bf16.mxu0 0
    %1119 = vmatpush1.bf16.msra.mxu0 0
    %1120 = vmatprep.subr.bf16.mxu0 0
    %1121 = vmatpush1.bf16.msra.mxu0 0
    %1122 = vmatprep.subr.bf16.mxu0 0
    %1123 = vmatpush1.bf16.msra.mxu0 0
    %1124 = vmatprep.subr.bf16.mxu0 0
    %1125 = vmatpush1.bf16.msra.mxu0 0
    %1126 = vmatprep.subr.bf16.mxu0 0
    %1127 = vmatpush1.bf16.msra.mxu0 0
    %1128 = vmatprep.subr.bf16.mxu0 0
    %1129 = vmatpush1.bf16.msra.mxu0 0
    %1130 = vmatprep.subr.bf16.mxu0 0
    %1131 = vmatpush1.bf16.msra.mxu0 0
    %1132 = vmatprep.subr.bf16.mxu0 0
    %1133 = vmatpush1.bf16.msra.mxu0 0
    %1134 = vmatprep.subr.bf16.mxu0 0
    %1135 = vmatpush1.bf16.msra.mxu0 0
    %1136 = vmatprep.subr.bf16.mxu0 0
    %1137 = vmatpush1.bf16.msra.mxu0 0
    %1138 = vmatprep.mubr.bf16.mxu0 0
    %1139 = vmatmul.mubr.bf16.gmra.mrb[0].mxu0 %v1063
    %v1140 = vpop.f32.mrb[0].mxu0
    %v1141 = vadd.f32 %v1039, %v1140
    %v1142 = vpop.f32.mrb[0].mxu0
    %v1143 = vpop.f32.mrb[0].mxu0
    %v1144 = vpop.f32.mrb[0].mxu0
    %1145 = vdwg.mxu0
    %v1146 = vmax.f32 %v1100, 0.0
    %v1147 = vmax.f32 %v1102, 0.0
    %v1148 = vmax.f32 %v1141, 0.0
    %v1149 = vpack.c.bf16 %v1146, %v1146
    %v1150 = vpack.c.bf16 %v1147, %v1147
    %v1151 = vpack.c.bf16 %v1148, %v1148
    %v1152 = vld [vmem:[#allocation2] sm:$0xff]
    %v1153 = vld [vmem:[#allocation2 + $0x8] sm:$0xf]
    %v1154 = vld [vmem:[#allocation2 + $0xc] sm:$0xff]
    %v1155 = vld [vmem:[#allocation2 + $0x14] sm:$0xf]
    %v1156 = vld [vmem:[#allocation2 + $0x18] sm:$0xff]
    %v1157 = vld [vmem:[#allocation2 + $0x20] sm:$0xf]
    %v1158 = vld [vmem:[#allocation2 + $0x24] sm:$0xff]
    %v1159 = vld [vmem:[#allocation2 + $0x2c] sm:$0xf]
    %v1160 = vld [vmem:[#allocation2 + $0x30] sm:$0xff]
    %v1161 = vld [vmem:[#allocation2 + $0x38] sm:$0xf]
    %v1162 = vld [vmem:[#allocation2 + $0x3c] sm:$0xff]
    %v1163 = vld [vmem:[#allocation2 + $0x44] sm:$0xf]
    %v1164 = vld [vmem:[#allocation2 + $0x48] sm:$0xff]
    %v1165 = vld [vmem:[#allocation2 + $0x50] sm:$0xf]
    %v1166 = vld [vmem:[#allocation2 + $0x54] sm:$0xff]
    %v1167 = vld [vmem:[#allocation2 + $0x5c] sm:$0xf]
    %v1168 = vld [vmem:[#allocation2 + $0x60] sm:$0xff]
    %v1169 = vld [vmem:[#allocation2 + $0x68] sm:$0xf]
    %v1170 = vld [vmem:[#allocation2 + $0x6c] sm:$0xff]
    %v1171 = vld [vmem:[#allocation2 + $0x74] sm:$0xf]
    %v1172 = vld [vmem:[#allocation2 + $0x78] sm:$0xff]
    %v1173 = vld [vmem:[#allocation2 + $0x80] sm:$0xf]
    %v1174 = vld [vmem:[#allocation2 + $0x84] sm:$0xff]
    %v1175 = vld [vmem:[#allocation2 + $0x8c] sm:$0xf]
    %v1176 = vld [vmem:[#allocation2 + $0x90] sm:$0xff]
    %v1177 = vld [vmem:[#allocation2 + $0x98] sm:$0xf]
    %v1178 = vld [vmem:[#allocation2 + $0x9c] sm:$0xff]
    %v1179 = vld [vmem:[#allocation2 + $0xa4] sm:$0xf]
    %v1180 = vld [vmem:[#allocation2 + $0xa8] sm:$0xff]
    %v1181 = vld [vmem:[#allocation2 + $0xb0] sm:$0xf]
    %v1182 = vld [vmem:[#allocation2 + $0xb4] sm:$0xff]
    %v1183 = vld [vmem:[#allocation2 + $0xbc] sm:$0xf]
    %v1184 = vld [vmem:[#allocation2 + $0xc0] sm:$0xff]
    %v1185 = vld [vmem:[#allocation2 + $0xc8] sm:$0xf]
    %v1186 = vld [vmem:[#allocation2 + $0xcc] sm:$0xff]
    %v1187 = vld [vmem:[#allocation2 + $0xd4] sm:$0xf]
    %v1188 = vld [vmem:[#allocation2 + $0xd8] sm:$0xff]
    %v1189 = vld [vmem:[#allocation2 + $0xe0] sm:$0xf]
    %v1190 = vld [vmem:[#allocation2 + $0xe4] sm:$0xff]
    %v1191 = vld [vmem:[#allocation2 + $0xec] sm:$0xf]
    %v1192 = vld [vmem:[#allocation2 + $0xf0] sm:$0xff]
    %v1193 = vld [vmem:[#allocation2 + $0xf8] sm:$0xf]
    %v1194 = vld [vmem:[#allocation2 + $0xfc] sm:$0xff]
    %v1195 = vld [vmem:[#allocation2 + $0x104] sm:$0xf]
    %v1196 = vld [vmem:[#allocation2 + $0x108] sm:$0xff]
    %v1197 = vld [vmem:[#allocation2 + $0x110] sm:$0xf]
    %v1198 = vld [vmem:[#allocation2 + $0x114] sm:$0xff]
    %v1199 = vld [vmem:[#allocation2 + $0x11c] sm:$0xf]
    %v1200 = vld [vmem:[#allocation2 + $0x120] sm:$0xff]
    %v1201 = vld [vmem:[#allocation2 + $0x128] sm:$0xf]
    %v1202 = vld [vmem:[#allocation2 + $0x12c] sm:$0xff]
    %v1203 = vld [vmem:[#allocation2 + $0x134] sm:$0xf]
    %v1204 = vld [vmem:[#allocation2 + $0x138] sm:$0xff]
    %v1205 = vld [vmem:[#allocation2 + $0x140] sm:$0xf]
    %v1206 = vld [vmem:[#allocation2 + $0x144] sm:$0xff]
    %v1207 = vld [vmem:[#allocation2 + $0x14c] sm:$0xf]
    %v1208 = vld [vmem:[#allocation2 + $0x150] sm:$0xff]
    %v1209 = vld [vmem:[#allocation2 + $0x158] sm:$0xf]
    %v1210 = vld [vmem:[#allocation2 + $0x15c] sm:$0xff]
    %v1211 = vld [vmem:[#allocation2 + $0x164] sm:$0xf]
    %v1212 = vld [vmem:[#allocation2 + $0x168] sm:$0xff]
    %v1213 = vld [vmem:[#allocation2 + $0x170] sm:$0xf]
    %v1214 = vld [vmem:[#allocation2 + $0x174] sm:$0xff]
    %v1215 = vld [vmem:[#allocation2 + $0x17c] sm:$0xf]
    %v1216 = vld [vmem:[#allocation2 + $0x180] sm:$0xff]
    %v1217 = vld [vmem:[#allocation2 + $0x188] sm:$0xf]
    %v1218 = vld [vmem:[#allocation2 + $0x18c] sm:$0xff]
    %v1219 = vld [vmem:[#allocation2 + $0x194] sm:$0xf]
    %v1220 = vld [vmem:[#allocation2 + $0x198] sm:$0xff]
    %v1221 = vld [vmem:[#allocation2 + $0x1a0] sm:$0xf]
    %v1222 = vld [vmem:[#allocation2 + $0x1a4] sm:$0xff]
    %v1223 = vld [vmem:[#allocation2 + $0x1ac] sm:$0xf]
    %v1224 = vld [vmem:[#allocation2 + $0x1b0] sm:$0xff]
    %v1225 = vld [vmem:[#allocation2 + $0x1b8] sm:$0xf]
    %v1226 = vld [vmem:[#allocation2 + $0x1bc] sm:$0xff]
    %v1227 = vld [vmem:[#allocation2 + $0x1c4] sm:$0xf]
    %v1228 = vld [vmem:[#allocation2 + $0x1c8] sm:$0xff]
    %v1229 = vld [vmem:[#allocation2 + $0x1d0] sm:$0xf]
    %v1230 = vld [vmem:[#allocation2 + $0x1d4] sm:$0xff]
    %v1231 = vld [vmem:[#allocation2 + $0x1dc] sm:$0xf]
    %v1232 = vld [vmem:[#allocation2 + $0x1e0] sm:$0xff]
    %v1233 = vld [vmem:[#allocation2 + $0x1e8] sm:$0xf]
    %v1234 = vld [vmem:[#allocation2 + $0x1ec] sm:$0xff]
    %v1235 = vld [vmem:[#allocation2 + $0x1f4] sm:$0xf]
    %v1236 = vld [vmem:[#allocation2 + $0x1f8] sm:$0xff]
    %v1237 = vld [vmem:[#allocation2 + $0x200] sm:$0xf]
    %v1238 = vld [vmem:[#allocation2 + $0x204] sm:$0xff]
    %v1239 = vld [vmem:[#allocation2 + $0x20c] sm:$0xf]
    %v1240 = vld [vmem:[#allocation2 + $0x210] sm:$0xff]
    %v1241 = vld [vmem:[#allocation2 + $0x218] sm:$0xf]
    %v1242 = vld [vmem:[#allocation2 + $0x21c] sm:$0xff]
    %v1243 = vld [vmem:[#allocation2 + $0x224] sm:$0xf]
    %v1244 = vld [vmem:[#allocation2 + $0x228] sm:$0xff]
    %v1245 = vld [vmem:[#allocation2 + $0x230] sm:$0xf]
    %v1246 = vld [vmem:[#allocation2 + $0x234] sm:$0xff]
    %v1247 = vld [vmem:[#allocation2 + $0x23c] sm:$0xf]
    %v1248 = vld [vmem:[%s8] sm:$0x7]
    %v1250 = vlaneseq
    %v1251 = vshrl.u32 %v1250, 7
    %v1252 = vsub.s32 0, %v1251
    %v1253 = vrot.slane %v1248, %v1252
    %v1254 = vlaneseq
    %v1255 = vshrl.u32 %v1254, 7
    %v1256 = vsub.s32 1, %v1255
    %v1257 = vrot.slane %v1248, %v1256
    %v1258 = vlaneseq
    %v1259 = vshrl.u32 %v1258, 7
    %v1260 = vsub.s32 2, %v1259
    %v1261 = vrot.slane %v1248, %v1260
    %v1361 = vunpack.c.l.b16 %v1152
    %v1362 = vunpack.c.h.b16 %v1152
    %v1363 = vunpack.c.l.b16 %v1153
    %v1364 = vunpack.c.l.b16 %v1154
    %v1365 = vunpack.c.h.b16 %v1154
    %v1366 = vunpack.c.l.b16 %v1155
    %v1367 = vunpack.c.l.b16 %v1156
    %v1368 = vunpack.c.h.b16 %v1156
    %v1369 = vunpack.c.l.b16 %v1157
    %v1370 = vunpack.c.l.b16 %v1158
    %v1371 = vunpack.c.h.b16 %v1158
    %v1372 = vunpack.c.l.b16 %v1159
    %v1373 = vunpack.c.l.b16 %v1160
    %v1374 = vunpack.c.h.b16 %v1160
    %v1375 = vunpack.c.l.b16 %v1161
    %v1376 = vunpack.c.l.b16 %v1162
    %v1377 = vunpack.c.h.b16 %v1162
    %v1378 = vunpack.c.l.b16 %v1163
    %v1379 = vunpack.c.l.b16 %v1164
    %v1380 = vunpack.c.h.b16 %v1164
    %v1381 = vunpack.c.l.b16 %v1165
    %v1382 = vunpack.c.l.b16 %v1166
    %v1383 = vunpack.c.h.b16 %v1166
    %v1384 = vunpack.c.l.b16 %v1167
    %v1385 = vunpack.c.l.b16 %v1168
    %v1386 = vunpack.c.h.b16 %v1168
    %v1387 = vunpack.c.l.b16 %v1169
    %v1388 = vunpack.c.l.b16 %v1170
    %v1389 = vunpack.c.h.b16 %v1170
    %v1390 = vunpack.c.l.b16 %v1171
    %v1391 = vunpack.c.l.b16 %v1172
    %v1392 = vunpack.c.h.b16 %v1172
    %v1393 = vunpack.c.l.b16 %v1173
    %v1394 = vunpack.c.l.b16 %v1174
    %v1395 = vunpack.c.h.b16 %v1174
    %v1396 = vunpack.c.l.b16 %v1175
    %v1397 = vunpack.c.l.b16 %v1176
    %v1398 = vunpack.c.h.b16 %v1176
    %v1399 = vunpack.c.l.b16 %v1177
    %v1400 = vunpack.c.l.b16 %v1178
    %v1401 = vunpack.c.h.b16 %v1178
    %v1402 = vunpack.c.l.b16 %v1179
    %v1403 = vunpack.c.l.b16 %v1180
    %v1404 = vunpack.c.h.b16 %v1180
    %v1405 = vunpack.c.l.b16 %v1181
    %v1406 = vunpack.c.l.b16 %v1182
    %v1407 = vunpack.c.h.b16 %v1182
    %v1408 = vunpack.c.l.b16 %v1183
    %v1409 = vunpack.c.l.b16 %v1184
    %v1410 = vunpack.c.h.b16 %v1184
    %v1411 = vunpack.c.l.b16 %v1185
    %v1412 = vunpack.c.l.b16 %v1186
    %v1413 = vunpack.c.h.b16 %v1186
    %v1414 = vunpack.c.l.b16 %v1187
    %v1415 = vunpack.c.l.b16 %v1188
    %v1416 = vunpack.c.h.b16 %v1188
    %v1417 = vunpack.c.l.b16 %v1189
    %v1418 = vunpack.c.l.b16 %v1190
    %v1419 = vunpack.c.h.b16 %v1190
    %v1420 = vunpack.c.l.b16 %v1191
    %v1421 = vunpack.c.l.b16 %v1192
    %v1422 = vunpack.c.h.b16 %v1192
    %v1423 = vunpack.c.l.b16 %v1193
    %v1424 = vunpack.c.l.b16 %v1194
    %v1425 = vunpack.c.h.b16 %v1194
    %v1426 = vunpack.c.l.b16 %v1195
    %v1427 = vunpack.c.l.b16 %v1196
    %v1428 = vunpack.c.h.b16 %v1196
    %v1429 = vunpack.c.l.b16 %v1197
    %v1430 = vunpack.c.l.b16 %v1198
    %v1431 = vunpack.c.h.b16 %v1198
    %v1432 = vunpack.c.l.b16 %v1199
    %v1433 = vunpack.c.l.b16 %v1200
    %v1434 = vunpack.c.h.b16 %v1200
    %v1435 = vunpack.c.l.b16 %v1201
    %v1436 = vunpack.c.l.b16 %v1202
    %v1437 = vunpack.c.h.b16 %v1202
    %v1438 = vunpack.c.l.b16 %v1203
    %v1439 = vunpack.c.l.b16 %v1204
    %v1440 = vunpack.c.h.b16 %v1204
    %v1441 = vunpack.c.l.b16 %v1205
    %v1442 = vunpack.c.l.b16 %v1206
    %v1443 = vunpack.c.h.b16 %v1206
    %v1444 = vunpack.c.l.b16 %v1207
    %v1445 = vunpack.c.l.b16 %v1208
    %v1446 = vunpack.c.h.b16 %v1208
    %v1447 = vunpack.c.l.b16 %v1209
    %v1448 = vunpack.c.l.b16 %v1210
    %v1449 = vunpack.c.h.b16 %v1210
    %v1450 = vunpack.c.l.b16 %v1211
    %v1451 = vunpack.c.l.b16 %v1212
    %v1452 = vunpack.c.h.b16 %v1212
    %v1453 = vunpack.c.l.b16 %v1213
    %v1454 = vunpack.c.l.b16 %v1214
    %v1455 = vunpack.c.h.b16 %v1214
    %v1456 = vunpack.c.l.b16 %v1215
    %v1457 = vunpack.c.l.b16 %v1216
    %v1458 = vunpack.c.h.b16 %v1216
    %v1459 = vunpack.c.l.b16 %v1217
    %v1460 = vunpack.c.l.b16 %v1218
    %v1461 = vunpack.c.h.b16 %v1218
    %v1462 = vunpack.c.l.b16 %v1219
    %v1463 = vunpack.c.l.b16 %v1220
    %v1464 = vunpack.c.h.b16 %v1220
    %v1465 = vunpack.c.l.b16 %v1221
    %v1466 = vunpack.c.l.b16 %v1222
    %v1467 = vunpack.c.h.b16 %v1222
    %v1468 = vunpack.c.l.b16 %v1223
    %v1469 = vunpack.c.l.b16 %v1224
    %v1470 = vunpack.c.h.b16 %v1224
    %v1471 = vunpack.c.l.b16 %v1225
    %v1472 = vunpack.c.l.b16 %v1226
    %v1473 = vunpack.c.h.b16 %v1226
    %v1474 = vunpack.c.l.b16 %v1227
    %v1475 = vunpack.c.l.b16 %v1228
    %v1476 = vunpack.c.h.b16 %v1228
    %v1477 = vunpack.c.l.b16 %v1229
    %v1478 = vunpack.c.l.b16 %v1230
    %v1479 = vunpack.c.h.b16 %v1230
    %v1480 = vunpack.c.l.b16 %v1231
    %v1481 = vunpack.c.l.b16 %v1232
    %v1482 = vunpack.c.h.b16 %v1232
    %v1483 = vunpack.c.l.b16 %v1233
    %v1484 = vunpack.c.l.b16 %v1234
    %v1485 = vunpack.c.h.b16 %v1234
    %v1486 = vunpack.c.l.b16 %v1235
    %v1487 = vunpack.c.l.b16 %v1236
    %v1488 = vunpack.c.h.b16 %v1236
    %v1489 = vunpack.c.l.b16 %v1237
    %v1490 = vunpack.c.l.b16 %v1238
    %v1491 = vunpack.c.h.b16 %v1238
    %v1492 = vunpack.c.l.b16 %v1239
    %v1493 = vunpack.c.l.b16 %v1240
    %v1494 = vunpack.c.h.b16 %v1240
    %v1495 = vunpack.c.l.b16 %v1241
    %v1496 = vunpack.c.l.b16 %v1242
    %v1497 = vunpack.c.h.b16 %v1242
    %v1498 = vunpack.c.l.b16 %v1243
    %v1499 = vunpack.c.l.b16 %v1244
    %v1500 = vunpack.c.h.b16 %v1244
    %v1501 = vunpack.c.l.b16 %v1245
    %v1502 = vunpack.c.l.b16 %v1246
    %v1503 = vunpack.c.h.b16 %v1246
    %v1504 = vunpack.c.l.b16 %v1247
    %v1505 = vpack.c.b16 %v1364, %v1361
    %v1506 = vpack.c.b16 %v1365, %v1362
    %v1507 = vpack.c.b16 %v1366, %v1363
    %v1508 = vpack.c.b16 %v1370, %v1367
    %v1509 = vpack.c.b16 %v1371, %v1368
    %v1510 = vpack.c.b16 %v1372, %v1369
    %v1511 = vpack.c.b16 %v1376, %v1373
    %v1512 = vpack.c.b16 %v1377, %v1374
    %v1513 = vpack.c.b16 %v1378, %v1375
    %v1514 = vpack.c.b16 %v1382, %v1379
    %v1515 = vpack.c.b16 %v1383, %v1380
    %v1516 = vpack.c.b16 %v1384, %v1381
    %v1517 = vpack.c.b16 %v1388, %v1385
    %v1518 = vpack.c.b16 %v1389, %v1386
    %v1519 = vpack.c.b16 %v1390, %v1387
    %v1520 = vpack.c.b16 %v1394, %v1391
    %v1521 = vpack.c.b16 %v1395, %v1392
    %v1522 = vpack.c.b16 %v1396, %v1393
    %v1523 = vpack.c.b16 %v1400, %v1397
    %v1524 = vpack.c.b16 %v1401, %v1398
    %v1525 = vpack.c.b16 %v1402, %v1399
    %v1526 = vpack.c.b16 %v1406, %v1403
    %v1527 = vpack.c.b16 %v1407, %v1404
    %v1528 = vpack.c.b16 %v1408, %v1405
    %v1529 = vpack.c.b16 %v1412, %v1409
    %v1530 = vpack.c.b16 %v1413, %v1410
    %v1531 = vpack.c.b16 %v1414, %v1411
    %v1532 = vpack.c.b16 %v1418, %v1415
    %v1533 = vpack.c.b16 %v1419, %v1416
    %v1534 = vpack.c.b16 %v1420, %v1417
    %v1535 = vpack.c.b16 %v1424, %v1421
    %v1536 = vpack.c.b16 %v1425, %v1422
    %v1537 = vpack.c.b16 %v1426, %v1423
    %v1538 = vpack.c.b16 %v1430, %v1427
    %v1539 = vpack.c.b16 %v1431, %v1428
    %v1540 = vpack.c.b16 %v1432, %v1429
    %v1541 = vpack.c.b16 %v1436, %v1433
    %v1542 = vpack.c.b16 %v1437, %v1434
    %v1543 = vpack.c.b16 %v1438, %v1435
    %v1544 = vpack.c.b16 %v1442, %v1439
    %v1545 = vpack.c.b16 %v1443, %v1440
    %v1546 = vpack.c.b16 %v1444, %v1441
    %v1547 = vpack.c.b16 %v1448, %v1445
    %v1548 = vpack.c.b16 %v1449, %v1446
    %v1549 = vpack.c.b16 %v1450, %v1447
    %v1550 = vpack.c.b16 %v1454, %v1451
    %v1551 = vpack.c.b16 %v1455, %v1452
    %v1552 = vpack.c.b16 %v1456, %v1453
    %v1553 = vpack.c.b16 %v1460, %v1457
    %v1554 = vpack.c.b16 %v1461, %v1458
    %v1555 = vpack.c.b16 %v1462, %v1459
    %v1556 = vpack.c.b16 %v1466, %v1463
    %v1557 = vpack.c.b16 %v1467, %v1464
    %v1558 = vpack.c.b16 %v1468, %v1465
    %v1559 = vpack.c.b16 %v1472, %v1469
    %v1560 = vpack.c.b16 %v1473, %v1470
    %v1561 = vpack.c.b16 %v1474, %v1471
    %v1562 = vpack.c.b16 %v1478, %v1475
    %v1563 = vpack.c.b16 %v1479, %v1476
    %v1564 = vpack.c.b16 %v1480, %v1477
    %v1565 = vpack.c.b16 %v1484, %v1481
    %v1566 = vpack.c.b16 %v1485, %v1482
    %v1567 = vpack.c.b16 %v1486, %v1483
    %v1568 = vpack.c.b16 %v1490, %v1487
    %v1569 = vpack.c.b16 %v1491, %v1488
    %v1570 = vpack.c.b16 %v1492, %v1489
    %v1571 = vpack.c.b16 %v1496, %v1493
    %v1572 = vpack.c.b16 %v1497, %v1494
    %v1573 = vpack.c.b16 %v1498, %v1495
    %v1574 = vpack.c.b16 %v1502, %v1499
    %v1575 = vpack.c.b16 %v1503, %v1500
    %v1576 = vpack.c.b16 %v1504, %v1501
    %1649 = vmatprep.subr.bf16.mxu0 %v1506
    %1650 = vmatpush1.bf16.msra.mxu0 %v1505
    %1651 = vmatprep.subr.bf16.mxu0 %v1509
    %1652 = vmatpush1.bf16.msra.mxu0 %v1508
    %1653 = vmatprep.subr.bf16.mxu0 %v1512
    %1654 = vmatpush1.bf16.msra.mxu0 %v1511
    %1655 = vmatprep.subr.bf16.mxu0 %v1515
    %1656 = vmatpush1.bf16.msra.mxu0 %v1514
    %1657 = vmatprep.subr.bf16.mxu0 %v1518
    %1658 = vmatpush1.bf16.msra.mxu0 %v1517
    %1659 = vmatprep.subr.bf16.mxu0 %v1521
    %1660 = vmatpush1.bf16.msra.mxu0 %v1520
    %1661 = vmatprep.subr.bf16.mxu0 %v1524
    %1662 = vmatpush1.bf16.msra.mxu0 %v1523
    %1663 = vmatprep.subr.bf16.mxu0 %v1527
    %1664 = vmatpush1.bf16.msra.mxu0 %v1526
    %1665 = vmatprep.subr.bf16.mxu0 %v1530
    %1666 = vmatpush1.bf16.msra.mxu0 %v1529
    %1667 = vmatprep.subr.bf16.mxu0 %v1533
    %1668 = vmatpush1.bf16.msra.mxu0 %v1532
    %1669 = vmatprep.subr.bf16.mxu0 %v1536
    %1670 = vmatpush1.bf16.msra.mxu0 %v1535
    %1671 = vmatprep.subr.bf16.mxu0 %v1539
    %1672 = vmatpush1.bf16.msra.mxu0 %v1538
    %1673 = vmatprep.subr.bf16.mxu0 %v1542
    %1674 = vmatpush1.bf16.msra.mxu0 %v1541
    %1675 = vmatprep.subr.bf16.mxu0 %v1545
    %1676 = vmatpush1.bf16.msra.mxu0 %v1544
    %1677 = vmatprep.subr.bf16.mxu0 %v1548
    %1678 = vmatpush1.bf16.msra.mxu0 %v1547
    %1679 = vmatprep.subr.bf16.mxu0 %v1551
    %1680 = vmatpush1.bf16.msra.mxu0 %v1550
    %1681 = vmatprep.mubr.bf16.mxu0 %v1150
    %1682 = vmatmul.mubr.bf16.gmra.mrb[0].mxu0 %v1149
    %v1683 = vpop.f32.mrb[0].mxu0
    %v1684 = vadd.f32 %v1253, %v1683
    %v1685 = vpop.f32.mrb[0].mxu0
    %v1686 = vadd.f32 %v1257, %v1685
    %v1687 = vpop.f32.mrb[0].mxu0
    %v1688 = vpop.f32.mrb[0].mxu0
    %1689 = vdwg.mxu0
    %1690 = vmatprep.subr.bf16.mxu0 %v1554
    %1691 = vmatpush1.bf16.msra.mxu0 %v1553
    %1692 = vmatprep.subr.bf16.mxu0 %v1557
    %1693 = vmatpush1.bf16.msra.mxu0 %v1556
    %1694 = vmatprep.subr.bf16.mxu0 %v1560
    %1695 = vmatpush1.bf16.msra.mxu0 %v1559
    %1696 = vmatprep.subr.bf16.mxu0 %v1563
    %1697 = vmatpush1.bf16.msra.mxu0 %v1562
    %1698 = vmatprep.subr.bf16.mxu0 %v1566
    %1699 = vmatpush1.bf16.msra.mxu0 %v1565
    %1700 = vmatprep.subr.bf16.mxu0 %v1569
    %1701 = vmatpush1.bf16.msra.mxu0 %v1568
    %1702 = vmatprep.subr.bf16.mxu0 %v1572
    %1703 = vmatpush1.bf16.msra.mxu0 %v1571
    %1704 = vmatprep.subr.bf16.mxu0 %v1575
    %1705 = vmatpush1.bf16.msra.mxu0 %v1574
    %1706 = vmatprep.subr.bf16.mxu0 0
    %1707 = vmatpush1.bf16.msra.mxu0 0
    %1708 = vmatprep.subr.bf16.mxu0 0
    %1709 = vmatpush1.bf16.msra.mxu0 0
    %1710 = vmatprep.subr.bf16.mxu0 0
    %1711 = vmatpush1.bf16.msra.mxu0 0
    %1712 = vmatprep.subr.bf16.mxu0 0
    %1713 = vmatpush1.bf16.msra.mxu0 0
    %1714 = vmatprep.subr.bf16.mxu0 0
    %1715 = vmatpush1.bf16.msra.mxu0 0
    %1716 = vmatprep.subr.bf16.mxu0 0
    %1717 = vmatpush1.bf16.msra.mxu0 0
    %1718 = vmatprep.subr.bf16.mxu0 0
    %1719 = vmatpush1.bf16.msra.mxu0 0
    %1720 = vmatprep.subr.bf16.mxu0 0
    %1721 = vmatpush1.bf16.msra.mxu0 0
    %1722 = vmatprep.mubr.bf16.mxu0 0
    %1723 = vmatmul.mubr.bf16.gmra.mrb[0].mxu0 %v1151
    %v1724 = vpop.f32.mrb[0].mxu0
    %v1725 = vadd.f32 %v1684, %v1724
    %v1726 = vpop.f32.mrb[0].mxu0
    %v1727 = vadd.f32 %v1686, %v1726
    %v1728 = vpop.f32.mrb[0].mxu0
    %v1729 = vpop.f32.mrb[0].mxu0
    %1730 = vdwg.mxu0
    %1731 = vmatprep.subr.bf16.mxu0 0
    %1732 = vmatpush1.bf16.msra.mxu0 %v1507
    %1733 = vmatprep.subr.bf16.mxu0 0
    %1734 = vmatpush1.bf16.msra.mxu0 %v1510
    %1735 = vmatprep.subr.bf16.mxu0 0
    %1736 = vmatpush1.bf16.msra.mxu0 %v1513
    %1737 = vmatprep.subr.bf16.mxu0 0
    %1738 = vmatpush1.bf16.msra.mxu0 %v1516
    %1739 = vmatprep.subr.bf16.mxu0 0
    %1740 = vmatpush1.bf16.msra.mxu0 %v1519
    %1741 = vmatprep.subr.bf16.mxu0 0
    %1742 = vmatpush1.bf16.msra.mxu0 %v1522
    %1743 = vmatprep.subr.bf16.mxu0 0
    %1744 = vmatpush1.bf16.msra.mxu0 %v1525
    %1745 = vmatprep.subr.bf16.mxu0 0
    %1746 = vmatpush1.bf16.msra.mxu0 %v1528
    %1747 = vmatprep.subr.bf16.mxu0 0
    %1748 = vmatpush1.bf16.msra.mxu0 %v1531
    %1749 = vmatprep.subr.bf16.mxu0 0
    %1750 = vmatpush1.bf16.msra.mxu0 %v1534
    %1751 = vmatprep.subr.bf16.mxu0 0
    %1752 = vmatpush1.bf16.msra.mxu0 %v1537
    %1753 = vmatprep.subr.bf16.mxu0 0
    %1754 = vmatpush1.bf16.msra.mxu0 %v1540
    %1755 = vmatprep.subr.bf16.mxu0 0
    %1756 = vmatpush1.bf16.msra.mxu0 %v1543
    %1757 = vmatprep.subr.bf16.mxu0 0
    %1758 = vmatpush1.bf16.msra.mxu0 %v1546
    %1759 = vmatprep.subr.bf16.mxu0 0
    %1760 = vmatpush1.bf16.msra.mxu0 %v1549
    %1761 = vmatprep.subr.bf16.mxu0 0
    %1762 = vmatpush1.bf16.msra.mxu0 %v1552
    %1763 = vmatprep.mubr.bf16.mxu0 %v1150
    %1764 = vmatmul.mubr.bf16.gmra.mrb[0].mxu0 %v1149
    %v1765 = vpop.f32.mrb[0].mxu0
    %v1766 = vadd.f32 %v1261, %v1765
    %v1767 = vpop.f32.mrb[0].mxu0
    %v1768 = vpop.f32.mrb[0].mxu0
    %v1769 = vpop.f32.mrb[0].mxu0
    %1770 = vdwg.mxu0
    %1771 = vmatprep.subr.bf16.mxu0 0
    %1772 = vmatpush1.bf16.msra.mxu0 %v1555
    %1773 = vmatprep.subr.bf16.mxu0 0
    %1774 = vmatpush1.bf16.msra.mxu0 %v1558
    %1775 = vmatprep.subr.bf16.mxu0 0
    %1776 = vmatpush1.bf16.msra.mxu0 %v1561
    %1777 = vmatprep.subr.bf16.mxu0 0
    %1778 = vmatpush1.bf16.msra.mxu0 %v1564
    %1779 = vmatprep.subr.bf16.mxu0 0
    %1780 = vmatpush1.bf16.msra.mxu0 %v1567
    %1781 = vmatprep.subr.bf16.mxu0 0
    %1782 = vmatpush1.bf16.msra.mxu0 %v1570
    %1783 = vmatprep.subr.bf16.mxu0 0
    %1784 = vmatpush1.bf16.msra.mxu0 %v1573
    %1785 = vmatprep.subr.bf16.mxu0 0
    %1786 = vmatpush1.bf16.msra.mxu0 %v1576
    %1787 = vmatprep.subr.bf16.mxu0 0
    %1788 = vmatpush1.bf16.msra.mxu0 0
    %1789 = vmatprep.subr.bf16.mxu0 0
    %1790 = vmatpush1.bf16.msra.mxu0 0
    %1791 = vmatprep.subr.bf16.mxu0 0
    %1792 = vmatpush1.bf16.msra.mxu0 0
    %1793 = vmatprep.subr.bf16.mxu0 0
    %1794 = vmatpush1.bf16.msra.mxu0 0
    %1795 = vmatprep.subr.bf16.mxu0 0
    %1796 = vmatpush1.bf16.msra.mxu0 0
    %1797 = vmatprep.subr.bf16.mxu0 0
    %1798 = vmatpush1.bf16.msra.mxu0 0
    %1799 = vmatprep.subr.bf16.mxu0 0
    %1800 = vmatpush1.bf16.msra.mxu0 0
    %1801 = vmatprep.subr.bf16.mxu0 0
    %1802 = vmatpush1.bf16.msra.mxu0 0
    %1803 = vmatprep.mubr.bf16.mxu0 0
    %1804 = vmatmul.mubr.bf16.gmra.mrb[0].mxu0 %v1151
    %v1805 = vpop.f32.mrb[0].mxu0
    %v1806 = vadd.f32 %v1766, %v1805
    %v1807 = vpop.f32.mrb[0].mxu0
    %v1808 = vpop.f32.mrb[0].mxu0
    %v1809 = vpop.f32.mrb[0].mxu0
    %1810 = vdwg.mxu0
    %v1811 = vmax.f32 %v1725, 0.0
    %v1812 = vmax.f32 %v1727, 0.0
    %v1813 = vmax.f32 %v1806, 0.0
    %v1814 = vpack.c.bf16 %v1811, %v1811
    %v1815 = vpack.c.bf16 %v1812, %v1812
    %v1816 = vpack.c.bf16 %v1813, %v1813
    %v1817 = vld [vmem:[#allocation4] sm:$0xf]
    %v1818 = vld [vmem:[#allocation4 + $0x4] sm:$0xf]
    %v1819 = vld [vmem:[#allocation4 + $0x8] sm:$0xf]
    %v1820 = vld [vmem:[#allocation4 + $0xc] sm:$0xf]
    %v1821 = vld [vmem:[#allocation4 + $0x10] sm:$0xf]
    %v1822 = vld [vmem:[#allocation4 + $0x14] sm:$0xf]
    %v1823 = vld [vmem:[#allocation4 + $0x18] sm:$0xf]
    %v1824 = vld [vmem:[#allocation4 + $0x1c] sm:$0xf]
    %v1825 = vld [vmem:[#allocation4 + $0x20] sm:$0xf]
    %v1826 = vld [vmem:[#allocation4 + $0x24] sm:$0xf]
    %v1827 = vld [vmem:[#allocation4 + $0x28] sm:$0xf]
    %v1828 = vld [vmem:[#allocation4 + $0x2c] sm:$0xf]
    %v1829 = vld [vmem:[#allocation4 + $0x30] sm:$0xf]
    %v1830 = vld [vmem:[#allocation4 + $0x34] sm:$0xf]
    %v1831 = vld [vmem:[#allocation4 + $0x38] sm:$0xf]
    %v1832 = vld [vmem:[#allocation4 + $0x3c] sm:$0xf]
    %v1833 = vld [vmem:[#allocation4 + $0x40] sm:$0xf]
    %v1834 = vld [vmem:[#allocation4 + $0x44] sm:$0xf]
    %v1835 = vld [vmem:[#allocation4 + $0x48] sm:$0xf]
    %v1836 = vld [vmem:[#allocation4 + $0x4c] sm:$0xf]
    %v1837 = vld [vmem:[#allocation4 + $0x50] sm:$0xf]
    %v1838 = vld [vmem:[#allocation4 + $0x54] sm:$0xf]
    %v1839 = vld [vmem:[#allocation4 + $0x58] sm:$0xf]
    %v1840 = vld [vmem:[#allocation4 + $0x5c] sm:$0xf]
    %v1841 = vld [vmem:[#allocation4 + $0x60] sm:$0xf]
    %v1842 = vld [vmem:[#allocation4 + $0x64] sm:$0xf]
    %v1843 = vld [vmem:[#allocation4 + $0x68] sm:$0xf]
    %v1844 = vld [vmem:[#allocation4 + $0x6c] sm:$0xf]
    %v1845 = vld [vmem:[#allocation4 + $0x70] sm:$0xf]
    %v1846 = vld [vmem:[#allocation4 + $0x74] sm:$0xf]
    %v1847 = vld [vmem:[#allocation4 + $0x78] sm:$0xf]
    %v1848 = vld [vmem:[#allocation4 + $0x7c] sm:$0xf]
    %v1849 = vld [vmem:[#allocation4 + $0x80] sm:$0xf]
    %v1850 = vld [vmem:[#allocation4 + $0x84] sm:$0xf]
    %v1851 = vld [vmem:[#allocation4 + $0x88] sm:$0xf]
    %v1852 = vld [vmem:[#allocation4 + $0x8c] sm:$0xf]
    %v1853 = vld [vmem:[#allocation4 + $0x90] sm:$0xf]
    %v1854 = vld [vmem:[#allocation4 + $0x94] sm:$0xf]
    %v1855 = vld [vmem:[#allocation4 + $0x98] sm:$0xf]
    %v1856 = vld [vmem:[#allocation4 + $0x9c] sm:$0xf]
    %v1857 = vld [vmem:[#allocation4 + $0xa0] sm:$0xf]
    %v1858 = vld [vmem:[#allocation4 + $0xa4] sm:$0xf]
    %v1859 = vld [vmem:[#allocation4 + $0xa8] sm:$0xf]
    %v1860 = vld [vmem:[#allocation4 + $0xac] sm:$0xf]
    %v1861 = vld [vmem:[#allocation4 + $0xb0] sm:$0xf]
    %v1862 = vld [vmem:[#allocation4 + $0xb4] sm:$0xf]
    %v1863 = vld [vmem:[#allocation4 + $0xb8] sm:$0xf]
    %v1864 = vld [vmem:[#allocation4 + $0xbc] sm:$0xf]
    %v1865 = vld [vmem:[%s10] sm:$0x1]
    %v1867 = vlaneseq
    %v1868 = vshrl.u32 %v1867, 7
    %v1869 = vsub.s32 0, %v1868
    %v1870 = vrot.slane %v1865, %v1869
    %v1920 = vunpack.c.l.b16 %v1817
    %v1921 = vunpack.c.l.b16 %v1818
    %v1922 = vunpack.c.l.b16 %v1819
    %v1923 = vunpack.c.l.b16 %v1820
    %v1924 = vunpack.c.l.b16 %v1821
    %v1925 = vunpack.c.l.b16 %v1822
    %v1926 = vunpack.c.l.b16 %v1823
    %v1927 = vunpack.c.l.b16 %v1824
    %v1928 = vunpack.c.l.b16 %v1825
    %v1929 = vunpack.c.l.b16 %v1826
    %v1930 = vunpack.c.l.b16 %v1827
    %v1931 = vunpack.c.l.b16 %v1828
    %v1932 = vunpack.c.l.b16 %v1829
    %v1933 = vunpack.c.l.b16 %v1830
    %v1934 = vunpack.c.l.b16 %v1831
    %v1935 = vunpack.c.l.b16 %v1832
    %v1936 = vunpack.c.l.b16 %v1833
    %v1937 = vunpack.c.l.b16 %v1834
    %v1938 = vunpack.c.l.b16 %v1835
    %v1939 = vunpack.c.l.b16 %v1836
    %v1940 = vunpack.c.l.b16 %v1837
    %v1941 = vunpack.c.l.b16 %v1838
    %v1942 = vunpack.c.l.b16 %v1839
    %v1943 = vunpack.c.l.b16 %v1840
    %v1944 = vunpack.c.l.b16 %v1841
    %v1945 = vunpack.c.l.b16 %v1842
    %v1946 = vunpack.c.l.b16 %v1843
    %v1947 = vunpack.c.l.b16 %v1844
    %v1948 = vunpack.c.l.b16 %v1845
    %v1949 = vunpack.c.l.b16 %v1846
    %v1950 = vunpack.c.l.b16 %v1847
    %v1951 = vunpack.c.l.b16 %v1848
    %v1952 = vunpack.c.l.b16 %v1849
    %v1953 = vunpack.c.l.b16 %v1850
    %v1954 = vunpack.c.l.b16 %v1851
    %v1955 = vunpack.c.l.b16 %v1852
    %v1956 = vunpack.c.l.b16 %v1853
    %v1957 = vunpack.c.l.b16 %v1854
    %v1958 = vunpack.c.l.b16 %v1855
    %v1959 = vunpack.c.l.b16 %v1856
    %v1960 = vunpack.c.l.b16 %v1857
    %v1961 = vunpack.c.l.b16 %v1858
    %v1962 = vunpack.c.l.b16 %v1859
    %v1963 = vunpack.c.l.b16 %v1860
    %v1964 = vunpack.c.l.b16 %v1861
    %v1965 = vunpack.c.l.b16 %v1862
    %v1966 = vunpack.c.l.b16 %v1863
    %v1967 = vunpack.c.l.b16 %v1864
    %v1968 = vpack.c.b16 %v1921, %v1920
    %v1969 = vpack.c.b16 %v1923, %v1922
    %v1970 = vpack.c.b16 %v1925, %v1924
    %v1971 = vpack.c.b16 %v1927, %v1926
    %v1972 = vpack.c.b16 %v1929, %v1928
    %v1973 = vpack.c.b16 %v1931, %v1930
    %v1974 = vpack.c.b16 %v1933, %v1932
    %v1975 = vpack.c.b16 %v1935, %v1934
    %v1976 = vpack.c.b16 %v1937, %v1936
    %v1977 = vpack.c.b16 %v1939, %v1938
    %v1978 = vpack.c.b16 %v1941, %v1940
    %v1979 = vpack.c.b16 %v1943, %v1942
    %v1980 = vpack.c.b16 %v1945, %v1944
    %v1981 = vpack.c.b16 %v1947, %v1946
    %v1982 = vpack.c.b16 %v1949, %v1948
    %v1983 = vpack.c.b16 %v1951, %v1950
    %v1984 = vpack.c.b16 %v1953, %v1952
    %v1985 = vpack.c.b16 %v1955, %v1954
    %v1986 = vpack.c.b16 %v1957, %v1956
    %v1987 = vpack.c.b16 %v1959, %v1958
    %v1988 = vpack.c.b16 %v1961, %v1960
    %v1989 = vpack.c.b16 %v1963, %v1962
    %v1990 = vpack.c.b16 %v1965, %v1964
    %v1991 = vpack.c.b16 %v1967, %v1966
    %2016 = vmatprep.subr.bf16.mxu0 0
    %2017 = vmatpush1.bf16.msra.mxu0 %v1968
    %2018 = vmatprep.subr.bf16.mxu0 0
    %2019 = vmatpush1.bf16.msra.mxu0 %v1969
    %2020 = vmatprep.subr.bf16.mxu0 0
    %2021 = vmatpush1.bf16.msra.mxu0 %v1970
    %2022 = vmatprep.subr.bf16.mxu0 0
    %2023 = vmatpush1.bf16.msra.mxu0 %v1971
    %2024 = vmatprep.subr.bf16.mxu0 0
    %2025 = vmatpush1.bf16.msra.mxu0 %v1972
    %2026 = vmatprep.subr.bf16.mxu0 0
    %2027 = vmatpush1.bf16.msra.mxu0 %v1973
    %2028 = vmatprep.subr.bf16.mxu0 0
    %2029 = vmatpush1.bf16.msra.mxu0 %v1974
    %2030 = vmatprep.subr.bf16.mxu0 0
    %2031 = vmatpush1.bf16.msra.mxu0 %v1975
    %2032 = vmatprep.subr.bf16.mxu0 0
    %2033 = vmatpush1.bf16.msra.mxu0 %v1976
    %2034 = vmatprep.subr.bf16.mxu0 0
    %2035 = vmatpush1.bf16.msra.mxu0 %v1977
    %2036 = vmatprep.subr.bf16.mxu0 0
    %2037 = vmatpush1.bf16.msra.mxu0 %v1978
    %2038 = vmatprep.subr.bf16.mxu0 0
    %2039 = vmatpush1.bf16.msra.mxu0 %v1979
    %2040 = vmatprep.subr.bf16.mxu0 0
    %2041 = vmatpush1.bf16.msra.mxu0 %v1980
    %2042 = vmatprep.subr.bf16.mxu0 0
    %2043 = vmatpush1.bf16.msra.mxu0 %v1981
    %2044 = vmatprep.subr.bf16.mxu0 0
    %2045 = vmatpush1.bf16.msra.mxu0 %v1982
    %2046 = vmatprep.subr.bf16.mxu0 0
    %2047 = vmatpush1.bf16.msra.mxu0 %v1983
    %2048 = vmatprep.mubr.bf16.mxu0 %v1815
    %2049 = vmatmul.mubr.bf16.gmra.mrb[0].mxu0 %v1814
    %v2050 = vpop.f32.mrb[0].mxu0
    %v2051 = vadd.f32 %v1870, %v2050
    %v2052 = vpop.f32.mrb[0].mxu0
    %v2053 = vpop.f32.mrb[0].mxu0
    %v2054 = vpop.f32.mrb[0].mxu0
    %2055 = vdwg.mxu0
    %2056 = vmatprep.subr.bf16.mxu0 0
    %2057 = vmatpush1.bf16.msra.mxu0 %v1984
    %2058 = vmatprep.subr.bf16.mxu0 0
    %2059 = vmatpush1.bf16.msra.mxu0 %v1985
    %2060 = vmatprep.subr.bf16.mxu0 0
    %2061 = vmatpush1.bf16.msra.mxu0 %v1986
    %2062 = vmatprep.subr.bf16.mxu0 0
    %2063 = vmatpush1.bf16.msra.mxu0 %v1987
    %2064 = vmatprep.subr.bf16.mxu0 0
    %2065 = vmatpush1.bf16.msra.mxu0 %v1988
    %2066 = vmatprep.subr.bf16.mxu0 0
    %2067 = vmatpush1.bf16.msra.mxu0 %v1989
    %2068 = vmatprep.subr.bf16.mxu0 0
    %2069 = vmatpush1.bf16.msra.mxu0 %v1990
    %2070 = vmatprep.subr.bf16.mxu0 0
    %2071 = vmatpush1.bf16.msra.mxu0 %v1991
    %2072 = vmatprep.subr.bf16.mxu0 0
    %2073 = vmatpush1.bf16.msra.mxu0 0
    %2074 = vmatprep.subr.bf16.mxu0 0
    %2075 = vmatpush1.bf16.msra.mxu0 0
    %2076 = vmatprep.subr.bf16.mxu0 0
    %2077 = vmatpush1.bf16.msra.mxu0 0
    %2078 = vmatprep.subr.bf16.mxu0 0
    %2079 = vmatpush1.bf16.msra.mxu0 0
    %2080 = vmatprep.subr.bf16.mxu0 0
    %2081 = vmatpush1.bf16.msra.mxu0 0
    %2082 = vmatprep.subr.bf16.mxu0 0
    %2083 = vmatpush1.bf16.msra.mxu0 0
    %2084 = vmatprep.subr.bf16.mxu0 0
    %2085 = vmatpush1.bf16.msra.mxu0 0
    %2086 = vmatprep.subr.bf16.mxu0 0
    %2087 = vmatpush1.bf16.msra.mxu0 0
    %2088 = vmatprep.mubr.bf16.mxu0 0
    %2089 = vmatmul.mubr.bf16.gmra.mrb[0].mxu0 %v1816
    %v2090 = vpop.f32.mrb[0].mxu0
    %v2091 = vadd.f32 %v2051, %v2090
    %v2092 = vpop.f32.mrb[0].mxu0
    %v2093 = vpop.f32.mrb[0].mxu0
    %v2094 = vpop.f32.mrb[0].mxu0
    %2095 = vdwg.mxu0
    %2096 = vst [vmem:[%s11] sm:$0xff] %v2091
    // Predicated region
    $region54: #{_lambda_.1} parent=1 // pred_check
      _
    $region55: #{_lambda_.1} parent=1 // pred_check_branch
      %2098 = sbr.rel (0) target = $region57
    $region56: #{_lambda_.1} parent=1 // pred_region
      _
    $region57: #{_lambda_.1} parent=1 // pred_fallthru
      _
    // Predicated region
    $region58: #{_lambda_.1} parent=1 // pred_check
      _
    $region59: #{_lambda_.1} parent=1 // pred_check_branch
      %2100 = sbr.rel (0) target = $region61
    $region60: #{_lambda_.1} parent=1 // pred_region
      _
    $region61: #{_lambda_.1} parent=1 // pred_fallthru
      _
    %2101 = vsyncpa [#allocation3], 1
    %2102 = vsyncpa [#allocation5], 1

</llo_original>
